<compile_context>
chip_gen: v5e
topology: v5e:2x2
jax: 0.10.0
libtpu: 0.0.40
codegen_flags: <defaults>
</compile_context>

<pallas_src>
import functools

import jax
import jax.numpy as jnp
from jax.experimental import pallas as pl
from jax.experimental.pallas import tpu as pltpu

LANE = 128


def _round_up(n, m):
    return ((n + m - 1) // m) * m


def _mlp_kernel(x_ref, w1_ref, b1_ref, w2_ref, b2_ref, w3_ref, b3_ref, o_ref):
    # Hidden layer 1: bf16 matmul, f32 accumulate, f32 epilogue (bias + ReLU).
    h = jnp.dot(x_ref[...], w1_ref[...], preferred_element_type=jnp.float32)
    h = jnp.maximum(h + b1_ref[...], 0.0).astype(x_ref.dtype)
    # Hidden layer 2.
    h = jnp.dot(h, w2_ref[...], preferred_element_type=jnp.float32)
    h = jnp.maximum(h + b2_ref[...], 0.0).astype(x_ref.dtype)
    # Output head (lane-padded to 128): no activation.
    out = jnp.dot(h, w3_ref[...], preferred_element_type=jnp.float32) + b3_ref[...]
    o_ref[...] = out.astype(o_ref.dtype)


def init_mlp_params(key, in_dim, hidden_dim, out_dim):
    """Deterministic init mimicking nn.Linear default (uniform +-1/sqrt(fan_in))."""
    dims = [(in_dim, hidden_dim), (hidden_dim, hidden_dim), (hidden_dim, out_dim)]
    params = []
    for (fan_in, fan_out) in dims:
        key, kw, kb = jax.random.split(key, 3)
        bound = 1.0 / jnp.sqrt(jnp.float32(fan_in))
        w = jax.random.uniform(kw, (fan_in, fan_out), jnp.float32, -bound, bound)
        b = jax.random.uniform(kb, (1, fan_out), jnp.float32, -bound, bound)
        params.append((w, b))
    return params


@functools.partial(jax.jit, static_argnames=("in_dim",))
def mlp_forward(x, params, *, in_dim):
    """x: NCHW (B, C, H, W). Returns (B, out_dim) logits, matching MLP.forward."""
    (w1, b1), (w2, b2), (w3, b3) = params
    hidden = w1.shape[1]
    out_dim = w3.shape[1]

    x2d = x.reshape(-1, in_dim).astype(jnp.float32)
    B = x2d.shape[0]

    # Lane/sublane friendly padding: K and N to multiples of 128, M to the tile size.
    K_pad = _round_up(in_dim, LANE)
    N_pad = _round_up(out_dim, LANE)
    TM = 128 if B <= 128 else 256          # 256 is MXU-native on v6e/v7x for big batches
    B_pad = _round_up(B, TM)

    # Zero-pad data + weights so the extra rows/cols contribute nothing (math unchanged).
    x_p = jnp.pad(x2d, ((0, B_pad - B), (0, K_pad - in_dim))).astype(jnp.bfloat16)
    w1_p = jnp.pad(w1, ((0, K_pad - in_dim), (0, 0))).astype(jnp.bfloat16)
    w2_p = w2.astype(jnp.bfloat16)
    w3_p = jnp.pad(w3, ((0, 0), (0, N_pad - out_dim))).astype(jnp.bfloat16)
    b1_p = b1.reshape(1, hidden).astype(jnp.float32)
    b2_p = b2.reshape(1, hidden).astype(jnp.float32)
    b3_p = jnp.pad(b3.reshape(1, out_dim), ((0, 0), (0, N_pad - out_dim))).astype(jnp.float32)

    grid = (B_pad // TM,)

    flops = 2 * B_pad * (K_pad * hidden + hidden * hidden + hidden * N_pad)
    bytes_accessed = (
        x_p.size * 2 + w1_p.size * 2 + w2_p.size * 2 + w3_p.size * 2
        + (b1_p.size + b2_p.size + b3_p.size) * 4
        + B_pad * N_pad * 4
    )

    out = pl.pallas_call(
        _mlp_kernel,
        out_shape=jax.ShapeDtypeStruct((B_pad, N_pad), jnp.float32),
        grid_spec=pltpu.PrefetchScalarGridSpec(
            num_scalar_prefetch=0,
            grid=grid,
            in_specs=[
                pl.BlockSpec((TM, K_pad), lambda i: (i, 0)),        # x tile (per grid step)
                pl.BlockSpec((K_pad, hidden), lambda i: (0, 0)),    # w1 resident
                pl.BlockSpec((1, hidden), lambda i: (0, 0)),        # b1
                pl.BlockSpec((hidden, hidden), lambda i: (0, 0)),   # w2 resident
                pl.BlockSpec((1, hidden), lambda i: (0, 0)),        # b2
                pl.BlockSpec((hidden, N_pad), lambda i: (0, 0)),    # w3 resident (lane-padded)
                pl.BlockSpec((1, N_pad), lambda i: (0, 0)),         # b3 (lane-padded)
            ],
            out_specs=pl.BlockSpec((TM, N_pad), lambda i: (i, 0)),
        ),
        compiler_params=pltpu.CompilerParams(
            dimension_semantics=("parallel",),      # shard batch tiles across v7x's 2 TCs
            vmem_limit_bytes=64 << 20,
        ),
        cost_estimate=pl.CostEstimate(
            flops=flops, transcendentals=0, bytes_accessed=bytes_accessed
        ),
    )(x_p, w1_p, b1_p, w2_p, b2_p, w3_p, b3_p)

    return out[:B, :out_dim]


if __name__ == "__main__":
    # Module defaults: in_channel=1, img_sz=28, hidden_dim=256, out_dim=10, n_layers=2
    in_channel, img_sz = 1, 28
    hidden_dim, out_dim = 256, 10
    in_dim = in_channel * img_sz * img_sz
    batch = 2

    key = jax.random.PRNGKey(0)
    key, kx = jax.random.split(key)
    x = jax.random.normal(kx, (batch, in_channel, img_sz, img_sz), jnp.float32)

    params = init_mlp_params(key, in_dim, hidden_dim, out_dim)

    y = mlp_forward(x, params, in_dim=in_dim)
    jax.block_until_ready(y)

    # Reference using the same bf16-quantized inputs/weights with f32 accumulation.
    (w1, b1), (w2, b2), (w3, b3) = params
    q = lambda a: a.astype(jnp.bfloat16).astype(jnp.float32)
    x2d = q(x.reshape(-1, in_dim))
    ref = jnp.maximum(x2d @ q(w1) + b1, 0.0)
    ref = q(ref)
    ref = jnp.maximum(ref @ q(w2) + b2, 0.0)
    ref = q(ref)
    ref = ref @ q(w3) + b3

    assert y.shape == (batch, out_dim)
    assert jnp.allclose(y, ref, atol=2e-2, rtol=2e-2), (
        f"max abs err {jnp.max(jnp.abs(y - ref))}"
    )

    print("KERNEL_OK")
</pallas_src>

<mosaic_0001>
module attributes {stable_mosaic.version = 11 : i64} {
  func.func @_mlp_kernel(%arg0: i32, %arg1: memref<128x896xbf16, #tpu.memory_space<vmem>>, %arg2: memref<896x256xbf16, #tpu.memory_space<vmem>>, %arg3: memref<1x256xf32, #tpu.memory_space<vmem>>, %arg4: memref<256x256xbf16, #tpu.memory_space<vmem>>, %arg5: memref<1x256xf32, #tpu.memory_space<vmem>>, %arg6: memref<256x128xbf16, #tpu.memory_space<vmem>>, %arg7: memref<1x128xf32, #tpu.memory_space<vmem>>, %arg8: memref<128x128xf32, #tpu.memory_space<vmem>>) attributes {dimension_semantics = [#tpu.dimension_semantics<parallel>], iteration_bounds = array<i64: 1>, scalar_prefetch = 0 : i64, scratch_operands = 0 : i64, tpu.core_type = #tpu.core_type<tc>, window_params = [{transform_indices = @transform_0, window_bounds = array<i64: 128, 896>}, {pipeline_mode = #tpu.pipeline_mode<synchronous>, transform_indices = @transform_1, window_bounds = array<i64: 896, 256>}, {pipeline_mode = #tpu.pipeline_mode<synchronous>, transform_indices = @transform_2, window_bounds = array<i64: 1, 256>}, {pipeline_mode = #tpu.pipeline_mode<synchronous>, transform_indices = @transform_3, window_bounds = array<i64: 256, 256>}, {pipeline_mode = #tpu.pipeline_mode<synchronous>, transform_indices = @transform_4, window_bounds = array<i64: 1, 256>}, {pipeline_mode = #tpu.pipeline_mode<synchronous>, transform_indices = @transform_5, window_bounds = array<i64: 256, 128>}, {pipeline_mode = #tpu.pipeline_mode<synchronous>, transform_indices = @transform_6, window_bounds = array<i64: 1, 128>}, {transform_indices = @transform_7, window_bounds = array<i64: 128, 128>}]} {
    %c0 = arith.constant 0 : index
    %c0_0 = arith.constant 0 : index
    %0 = vector.load %arg1[%c0, %c0_0] : memref<128x896xbf16, #tpu.memory_space<vmem>>, vector<128x896xbf16>
    %c0_1 = arith.constant 0 : index
    %c0_2 = arith.constant 0 : index
    %1 = vector.load %arg2[%c0_1, %c0_2] : memref<896x256xbf16, #tpu.memory_space<vmem>>, vector<896x256xbf16>
    %cst = arith.constant dense<0.000000e+00> : vector<128x256xf32>
    %2 = tpu.matmul %0, %1, %cst {dimension_numbers = #tpu.dot_dimension_numbers<[1], [0], [0], [1], [0, 0, 1, 1], [], []>} : vector<128x896xbf16>, vector<896x256xbf16>, vector<128x256xf32> -> vector<128x256xf32>
    %c0_3 = arith.constant 0 : index
    %c0_4 = arith.constant 0 : index
    %3 = vector.load %arg3[%c0_3, %c0_4] : memref<1x256xf32, #tpu.memory_space<vmem>>, vector<1x256xf32>
    %4 = vector.broadcast %3 : vector<1x256xf32> to vector<128x256xf32>
    %5 = arith.addf %2, %4 : vector<128x256xf32>
    %cst_5 = arith.constant 0.000000e+00 : f32
    %6 = vector.broadcast %cst_5 : f32 to vector<128x256xf32>
    %7 = arith.maximumf %5, %6 : vector<128x256xf32>
    %8 = arith.truncf %7 : vector<128x256xf32> to vector<128x256xbf16>
    %c0_6 = arith.constant 0 : index
    %c0_7 = arith.constant 0 : index
    %9 = vector.load %arg4[%c0_6, %c0_7] : memref<256x256xbf16, #tpu.memory_space<vmem>>, vector<256x256xbf16>
    %cst_8 = arith.constant dense<0.000000e+00> : vector<128x256xf32>
    %10 = tpu.matmul %8, %9, %cst_8 {dimension_numbers = #tpu.dot_dimension_numbers<[1], [0], [0], [1], [0, 0, 1, 1], [], []>} : vector<128x256xbf16>, vector<256x256xbf16>, vector<128x256xf32> -> vector<128x256xf32>
    %c0_9 = arith.constant 0 : index
    %c0_10 = arith.constant 0 : index
    %11 = vector.load %arg5[%c0_9, %c0_10] : memref<1x256xf32, #tpu.memory_space<vmem>>, vector<1x256xf32>
    %12 = vector.broadcast %11 : vector<1x256xf32> to vector<128x256xf32>
    %13 = arith.addf %10, %12 : vector<128x256xf32>
    %cst_11 = arith.constant 0.000000e+00 : f32
    %14 = vector.broadcast %cst_11 : f32 to vector<128x256xf32>
    %15 = arith.maximumf %13, %14 : vector<128x256xf32>
    %16 = arith.truncf %15 : vector<128x256xf32> to vector<128x256xbf16>
    %c0_12 = arith.constant 0 : index
    %c0_13 = arith.constant 0 : index
    %17 = vector.load %arg6[%c0_12, %c0_13] : memref<256x128xbf16, #tpu.memory_space<vmem>>, vector<256x128xbf16>
    %cst_14 = arith.constant dense<0.000000e+00> : vector<128x128xf32>
    %18 = tpu.matmul %16, %17, %cst_14 {dimension_numbers = #tpu.dot_dimension_numbers<[1], [0], [0], [1], [0, 0, 1, 1], [], []>} : vector<128x256xbf16>, vector<256x128xbf16>, vector<128x128xf32> -> vector<128x128xf32>
    %c0_15 = arith.constant 0 : index
    %c0_16 = arith.constant 0 : index
    %19 = vector.load %arg7[%c0_15, %c0_16] : memref<1x128xf32, #tpu.memory_space<vmem>>, vector<1x128xf32>
    %20 = vector.broadcast %19 : vector<1x128xf32> to vector<128x128xf32>
    %21 = arith.addf %18, %20 : vector<128x128xf32>
    %c0_17 = arith.constant 0 : index
    %c0_18 = arith.constant 0 : index
    %22 = vector.load %arg8[%c0_17, %c0_18] : memref<128x128xf32, #tpu.memory_space<vmem>>, vector<128x128xf32>
    tpu.vector_store %arg8[%c0_17, %c0_18], %21 {strides = array<i32>} : memref<128x128xf32, #tpu.memory_space<vmem>>, vector<128x128xf32>,
    return
  }
  func.func @transform_0(%arg0: i32) -> (i32, i32) {
    %c0_i32 = arith.constant 0 : i32
    %c0_i32_0 = arith.constant 0 : i32
    return %arg0, %c0_i32 : i32, i32
  }
  func.func @transform_1(%arg0: i32) -> (i32, i32) {
    %c0_i32 = arith.constant 0 : i32
    %c0_i32_0 = arith.constant 0 : i32
    %c0_i32_1 = arith.constant 0 : i32
    return %c0_i32, %c0_i32_0 : i32, i32
  }
  func.func @transform_2(%arg0: i32) -> (i32, i32) {
    %c0_i32 = arith.constant 0 : i32
    %c0_i32_0 = arith.constant 0 : i32
    %c0_i32_1 = arith.constant 0 : i32
    return %c0_i32, %c0_i32_0 : i32, i32
  }
  func.func @transform_3(%arg0: i32) -> (i32, i32) {
    %c0_i32 = arith.constant 0 : i32
    %c0_i32_0 = arith.constant 0 : i32
    %c0_i32_1 = arith.constant 0 : i32
    return %c0_i32, %c0_i32_0 : i32, i32
  }
  func.func @transform_4(%arg0: i32) -> (i32, i32) {
    %c0_i32 = arith.constant 0 : i32
    %c0_i32_0 = arith.constant 0 : i32
    %c0_i32_1 = arith.constant 0 : i32
    return %c0_i32, %c0_i32_0 : i32, i32
  }
  func.func @transform_5(%arg0: i32) -> (i32, i32) {
    %c0_i32 = arith.constant 0 : i32
    %c0_i32_0 = arith.constant 0 : i32
    %c0_i32_1 = arith.constant 0 : i32
    return %c0_i32, %c0_i32_0 : i32, i32
  }
  func.func @transform_6(%arg0: i32) -> (i32, i32) {
    %c0_i32 = arith.constant 0 : i32
    %c0_i32_0 = arith.constant 0 : i32
    %c0_i32_1 = arith.constant 0 : i32
    return %c0_i32, %c0_i32_0 : i32, i32
  }
  func.func @transform_7(%arg0: i32) -> (i32, i32) {
    %c0_i32 = arith.constant 0 : i32
    %c0_i32_0 = arith.constant 0 : i32
    return %arg0, %c0_i32 : i32, i32
  }
}

</mosaic_0001>

<llo_original>
// kernel: mlp_forward.1
$region0: #{mlp_forward.1}
  #allocation0 [shape = 'u32[]', space=smem, size = 0x4, offset = 0x4, fixed_abs, tag = 'smem constant byte address 0x4 - core index']
  #allocation1 [shape = 'u32[72,128]{1,0:T(1,128)}', space=vmem, size = 0x9000, scoped, tag = 'internal scratch']
  %s0 = inlined_call_operand.vmem [shape: bf16[128,896], index: 0, kind: input, shape index: {}]
  %s1 = inlined_call_operand.vmem [shape: bf16[896,256], index: 1, kind: input, shape index: {}]
  %s2 = inlined_call_operand.vmem [shape: f32[1,256], index: 2, kind: input, shape index: {}]
  %s3 = inlined_call_operand.vmem [shape: bf16[256,256], index: 3, kind: input, shape index: {}]
  %s4 = inlined_call_operand.vmem [shape: f32[1,256], index: 4, kind: input, shape index: {}]
  %s5 = inlined_call_operand.vmem [shape: bf16[256,128], index: 5, kind: input, shape index: {}]
  %s6 = inlined_call_operand.vmem [shape: f32[1,128], index: 6, kind: input, shape index: {}]
  %s7 = inlined_call_operand.vmem [shape: f32[128,128], index: 7, kind: output, shape index: {}]
  %s8 = sld [smem:[#allocation0]]
  $region38: #{mlp_forward.1} parent=0
    _
  %s10 = ssub.s32 1, %s8
  %s11 = scalar_select 0, %s10, %s8
  // Predicated region
  $region2: #{mlp_forward.1} parent=0 // pred_check
    _
  $region3: #{mlp_forward.1} parent=0 // pred_check_branch
    %13 = sbr.rel (0) target = $region5
  $region4: #{mlp_forward.1} parent=0 // pred_region
    _
  $region5: #{mlp_forward.1} parent=0 // pred_fallthru
    _
  // Predicated region
  $region6: #{mlp_forward.1} parent=0 // pred_check
    _
  $region7: #{mlp_forward.1} parent=0 // pred_check_branch
    %15 = sbr.rel (0) target = $region9
  $region8: #{mlp_forward.1} parent=0 // pred_region
    _
  $region9: #{mlp_forward.1} parent=0 // pred_fallthru
    _
  // Predicated region
  $region10: #{mlp_forward.1} parent=0 // pred_check
    _
  $region11: #{mlp_forward.1} parent=0 // pred_check_branch
    %17 = sbr.rel (0) target = $region13
  $region12: #{mlp_forward.1} parent=0 // pred_region
    _
  $region13: #{mlp_forward.1} parent=0 // pred_fallthru
    _
  // Predicated region
  $region14: #{mlp_forward.1} parent=0 // pred_check
    _
  $region15: #{mlp_forward.1} parent=0 // pred_check_branch
    %19 = sbr.rel (0) target = $region17
  $region16: #{mlp_forward.1} parent=0 // pred_region
    _
  $region17: #{mlp_forward.1} parent=0 // pred_fallthru
    _
  // Predicated region
  $region18: #{mlp_forward.1} parent=0 // pred_check
    _
  $region19: #{mlp_forward.1} parent=0 // pred_check_branch
    %21 = sbr.rel (0) target = $region21
  $region20: #{mlp_forward.1} parent=0 // pred_region
    _
  $region21: #{mlp_forward.1} parent=0 // pred_fallthru
    _
  // Predicated region
  $region22: #{mlp_forward.1} parent=0 // pred_check
    _
  $region23: #{mlp_forward.1} parent=0 // pred_check_branch
    %23 = sbr.rel (0) target = $region25
  $region24: #{mlp_forward.1} parent=0 // pred_region
    _
  $region25: #{mlp_forward.1} parent=0 // pred_fallthru
    _
  // Predicated region
  $region26: #{mlp_forward.1} parent=0 // pred_check
    _
  $region27: #{mlp_forward.1} parent=0 // pred_check_branch
    %25 = sbr.rel (0) target = $region29
  $region28: #{mlp_forward.1} parent=0 // pred_region
    _
  $region29: #{mlp_forward.1} parent=0 // pred_fallthru
    _
  %v26 = vld [vmem:[%s0] sm:$0xff]
  %v27 = vld [vmem:[%s0 + $0x8] sm:$0xff]
  %v28 = vld [vmem:[%s0 + $0x10] sm:$0xff]
  %v29 = vld [vmem:[%s0 + $0x18] sm:$0xf]
  %v30 = vld [vmem:[%s0 + $0x1c] sm:$0xff]
  %v31 = vld [vmem:[%s0 + $0x24] sm:$0xff]
  %v32 = vld [vmem:[%s0 + $0x2c] sm:$0xff]
  %v33 = vld [vmem:[%s0 + $0x34] sm:$0xf]
  %v34 = vld [vmem:[%s0 + $0x38] sm:$0xff]
  %v35 = vld [vmem:[%s0 + $0x40] sm:$0xff]
  %v36 = vld [vmem:[%s0 + $0x48] sm:$0xff]
  %v37 = vld [vmem:[%s0 + $0x50] sm:$0xf]
  %v38 = vld [vmem:[%s0 + $0x54] sm:$0xff]
  %v39 = vld [vmem:[%s0 + $0x5c] sm:$0xff]
  %v40 = vld [vmem:[%s0 + $0x64] sm:$0xff]
  %v41 = vld [vmem:[%s0 + $0x6c] sm:$0xf]
  %v42 = vld [vmem:[%s0 + $0x70] sm:$0xff]
  %v43 = vld [vmem:[%s0 + $0x78] sm:$0xff]
  %v44 = vld [vmem:[%s0 + $0x80] sm:$0xff]
  %v45 = vld [vmem:[%s0 + $0x88] sm:$0xf]
  %v46 = vld [vmem:[%s0 + $0x8c] sm:$0xff]
  %v47 = vld [vmem:[%s0 + $0x94] sm:$0xff]
  %v48 = vld [vmem:[%s0 + $0x9c] sm:$0xff]
  %v49 = vld [vmem:[%s0 + $0xa4] sm:$0xf]
  %v50 = vld [vmem:[%s0 + $0xa8] sm:$0xff]
  %v51 = vld [vmem:[%s0 + $0xb0] sm:$0xff]
  %v52 = vld [vmem:[%s0 + $0xb8] sm:$0xff]
  %v53 = vld [vmem:[%s0 + $0xc0] sm:$0xf]
  %v54 = vld [vmem:[%s0 + $0xc4] sm:$0xff]
  %v55 = vld [vmem:[%s0 + $0xcc] sm:$0xff]
  %v56 = vld [vmem:[%s0 + $0xd4] sm:$0xff]
  %v57 = vld [vmem:[%s0 + $0xdc] sm:$0xf]
  %v58 = vld [vmem:[%s0 + $0xe0] sm:$0xff]
  %v59 = vld [vmem:[%s0 + $0xe8] sm:$0xff]
  %v60 = vld [vmem:[%s0 + $0xf0] sm:$0xff]
  %v61 = vld [vmem:[%s0 + $0xf8] sm:$0xf]
  %v62 = vld [vmem:[%s0 + $0xfc] sm:$0xff]
  %v63 = vld [vmem:[%s0 + $0x104] sm:$0xff]
  %v64 = vld [vmem:[%s0 + $0x10c] sm:$0xff]
  %v65 = vld [vmem:[%s0 + $0x114] sm:$0xf]
  %v66 = vld [vmem:[%s0 + $0x118] sm:$0xff]
  %v67 = vld [vmem:[%s0 + $0x120] sm:$0xff]
  %v68 = vld [vmem:[%s0 + $0x128] sm:$0xff]
  %v69 = vld [vmem:[%s0 + $0x130] sm:$0xf]
  %v70 = vld [vmem:[%s0 + $0x134] sm:$0xff]
  %v71 = vld [vmem:[%s0 + $0x13c] sm:$0xff]
  %v72 = vld [vmem:[%s0 + $0x144] sm:$0xff]
  %v73 = vld [vmem:[%s0 + $0x14c] sm:$0xf]
  %v74 = vld [vmem:[%s0 + $0x150] sm:$0xff]
  %v75 = vld [vmem:[%s0 + $0x158] sm:$0xff]
  %v76 = vld [vmem:[%s0 + $0x160] sm:$0xff]
  %v77 = vld [vmem:[%s0 + $0x168] sm:$0xf]
  %v78 = vld [vmem:[%s0 + $0x16c] sm:$0xff]
  %v79 = vld [vmem:[%s0 + $0x174] sm:$0xff]
  %v80 = vld [vmem:[%s0 + $0x17c] sm:$0xff]
  %v81 = vld [vmem:[%s0 + $0x184] sm:$0xf]
  %v82 = vld [vmem:[%s0 + $0x188] sm:$0xff]
  %v83 = vld [vmem:[%s0 + $0x190] sm:$0xff]
  %v84 = vld [vmem:[%s0 + $0x198] sm:$0xff]
  %v85 = vld [vmem:[%s0 + $0x1a0] sm:$0xf]
  %v86 = vld [vmem:[%s0 + $0x1a4] sm:$0xff]
  %v87 = vld [vmem:[%s0 + $0x1ac] sm:$0xff]
  %v88 = vld [vmem:[%s0 + $0x1b4] sm:$0xff]
  %v89 = vld [vmem:[%s0 + $0x1bc] sm:$0xf]
  %v90 = vld [vmem:[%s1] sm:$0xff]
  %v91 = vld [vmem:[%s1 + $0x8] sm:$0xff]
  %v92 = vld [vmem:[%s1 + $0x10] sm:$0xff]
  %v93 = vld [vmem:[%s1 + $0x18] sm:$0xff]
  %v94 = vld [vmem:[%s1 + $0x20] sm:$0xff]
  %v95 = vld [vmem:[%s1 + $0x28] sm:$0xff]
  %v96 = vld [vmem:[%s1 + $0x30] sm:$0xff]
  %v97 = vld [vmem:[%s1 + $0x38] sm:$0xff]
  %v98 = vld [vmem:[%s1 + $0x40] sm:$0xff]
  %v99 = vld [vmem:[%s1 + $0x48] sm:$0xff]
  %v100 = vld [vmem:[%s1 + $0x50] sm:$0xff]
  %v101 = vld [vmem:[%s1 + $0x58] sm:$0xff]
  %v102 = vld [vmem:[%s1 + $0x60] sm:$0xff]
  %v103 = vld [vmem:[%s1 + $0x68] sm:$0xff]
  %v104 = vld [vmem:[%s1 + $0x70] sm:$0xff]
  %v105 = vld [vmem:[%s1 + $0x78] sm:$0xff]
  %v106 = vld [vmem:[%s1 + $0x80] sm:$0xff]
  %v107 = vld [vmem:[%s1 + $0x88] sm:$0xff]
  %v108 = vld [vmem:[%s1 + $0x90] sm:$0xff]
  %v109 = vld [vmem:[%s1 + $0x98] sm:$0xff]
  %v110 = vld [vmem:[%s1 + $0xa0] sm:$0xff]
  %v111 = vld [vmem:[%s1 + $0xa8] sm:$0xff]
  %v112 = vld [vmem:[%s1 + $0xb0] sm:$0xff]
  %v113 = vld [vmem:[%s1 + $0xb8] sm:$0xff]
  %v114 = vld [vmem:[%s1 + $0xc0] sm:$0xff]
  %v115 = vld [vmem:[%s1 + $0xc8] sm:$0xff]
  %v116 = vld [vmem:[%s1 + $0xd0] sm:$0xff]
  %v117 = vld [vmem:[%s1 + $0xd8] sm:$0xff]
  %v118 = vld [vmem:[%s1 + $0xe0] sm:$0xff]
  %v119 = vld [vmem:[%s1 + $0xe8] sm:$0xff]
  %v120 = vld [vmem:[%s1 + $0xf0] sm:$0xff]
  %v121 = vld [vmem:[%s1 + $0xf8] sm:$0xff]
  %v122 = vld [vmem:[%s1 + $0x100] sm:$0xff]
  %v123 = vld [vmem:[%s1 + $0x108] sm:$0xff]
  %v124 = vld [vmem:[%s1 + $0x110] sm:$0xff]
  %v125 = vld [vmem:[%s1 + $0x118] sm:$0xff]
  %v126 = vld [vmem:[%s1 + $0x120] sm:$0xff]
  %v127 = vld [vmem:[%s1 + $0x128] sm:$0xff]
  %v128 = vld [vmem:[%s1 + $0x130] sm:$0xff]
  %v129 = vld [vmem:[%s1 + $0x138] sm:$0xff]
  %v130 = vld [vmem:[%s1 + $0x140] sm:$0xff]
  %v131 = vld [vmem:[%s1 + $0x148] sm:$0xff]
  %v132 = vld [vmem:[%s1 + $0x150] sm:$0xff]
  %v133 = vld [vmem:[%s1 + $0x158] sm:$0xff]
  %v134 = vld [vmem:[%s1 + $0x160] sm:$0xff]
  %v135 = vld [vmem:[%s1 + $0x168] sm:$0xff]
  %v136 = vld [vmem:[%s1 + $0x170] sm:$0xff]
  %v137 = vld [vmem:[%s1 + $0x178] sm:$0xff]
  %v138 = vld [vmem:[%s1 + $0x180] sm:$0xff]
  %v139 = vld [vmem:[%s1 + $0x188] sm:$0xff]
  %v140 = vld [vmem:[%s1 + $0x190] sm:$0xff]
  %v141 = vld [vmem:[%s1 + $0x198] sm:$0xff]
  %v142 = vld [vmem:[%s1 + $0x1a0] sm:$0xff]
  %v143 = vld [vmem:[%s1 + $0x1a8] sm:$0xff]
  %v144 = vld [vmem:[%s1 + $0x1b0] sm:$0xff]
  %v145 = vld [vmem:[%s1 + $0x1b8] sm:$0xff]
  %v146 = vld [vmem:[%s1 + $0x1c0] sm:$0xff]
  %v147 = vld [vmem:[%s1 + $0x1c8] sm:$0xff]
  %v148 = vld [vmem:[%s1 + $0x1d0] sm:$0xff]
  %v149 = vld [vmem:[%s1 + $0x1d8] sm:$0xff]
  %v150 = vld [vmem:[%s1 + $0x1e0] sm:$0xff]
  %v151 = vld [vmem:[%s1 + $0x1e8] sm:$0xff]
  %v152 = vld [vmem:[%s1 + $0x1f0] sm:$0xff]
  %v153 = vld [vmem:[%s1 + $0x1f8] sm:$0xff]
  %v154 = vld [vmem:[%s1 + $0x200] sm:$0xff]
  %v155 = vld [vmem:[%s1 + $0x208] sm:$0xff]
  %v156 = vld [vmem:[%s1 + $0x210] sm:$0xff]
  %v157 = vld [vmem:[%s1 + $0x218] sm:$0xff]
  %v158 = vld [vmem:[%s1 + $0x220] sm:$0xff]
  %v159 = vld [vmem:[%s1 + $0x228] sm:$0xff]
  %v160 = vld [vmem:[%s1 + $0x230] sm:$0xff]
  %v161 = vld [vmem:[%s1 + $0x238] sm:$0xff]
  %v162 = vld [vmem:[%s1 + $0x240] sm:$0xff]
  %v163 = vld [vmem:[%s1 + $0x248] sm:$0xff]
  %v164 = vld [vmem:[%s1 + $0x250] sm:$0xff]
  %v165 = vld [vmem:[%s1 + $0x258] sm:$0xff]
  %v166 = vld [vmem:[%s1 + $0x260] sm:$0xff]
  %v167 = vld [vmem:[%s1 + $0x268] sm:$0xff]
  %v168 = vld [vmem:[%s1 + $0x270] sm:$0xff]
  %v169 = vld [vmem:[%s1 + $0x278] sm:$0xff]
  %v170 = vld [vmem:[%s1 + $0x280] sm:$0xff]
  %v171 = vld [vmem:[%s1 + $0x288] sm:$0xff]
  %v172 = vld [vmem:[%s1 + $0x290] sm:$0xff]
  %v173 = vld [vmem:[%s1 + $0x298] sm:$0xff]
  %v174 = vld [vmem:[%s1 + $0x2a0] sm:$0xff]
  %v175 = vld [vmem:[%s1 + $0x2a8] sm:$0xff]
  %v176 = vld [vmem:[%s1 + $0x2b0] sm:$0xff]
  %v177 = vld [vmem:[%s1 + $0x2b8] sm:$0xff]
  %v178 = vld [vmem:[%s1 + $0x2c0] sm:$0xff]
  %v179 = vld [vmem:[%s1 + $0x2c8] sm:$0xff]
  %v180 = vld [vmem:[%s1 + $0x2d0] sm:$0xff]
  %v181 = vld [vmem:[%s1 + $0x2d8] sm:$0xff]
  %v182 = vld [vmem:[%s1 + $0x2e0] sm:$0xff]
  %v183 = vld [vmem:[%s1 + $0x2e8] sm:$0xff]
  %v184 = vld [vmem:[%s1 + $0x2f0] sm:$0xff]
  %v185 = vld [vmem:[%s1 + $0x2f8] sm:$0xff]
  %v186 = vld [vmem:[%s1 + $0x300] sm:$0xff]
  %v187 = vld [vmem:[%s1 + $0x308] sm:$0xff]
  %v188 = vld [vmem:[%s1 + $0x310] sm:$0xff]
  %v189 = vld [vmem:[%s1 + $0x318] sm:$0xff]
  %v190 = vld [vmem:[%s1 + $0x320] sm:$0xff]
  %v191 = vld [vmem:[%s1 + $0x328] sm:$0xff]
  %v192 = vld [vmem:[%s1 + $0x330] sm:$0xff]
  %v193 = vld [vmem:[%s1 + $0x338] sm:$0xff]
  %v194 = vld [vmem:[%s1 + $0x340] sm:$0xff]
  %v195 = vld [vmem:[%s1 + $0x348] sm:$0xff]
  %v196 = vld [vmem:[%s1 + $0x350] sm:$0xff]
  %v197 = vld [vmem:[%s1 + $0x358] sm:$0xff]
  %v198 = vld [vmem:[%s1 + $0x360] sm:$0xff]
  %v199 = vld [vmem:[%s1 + $0x368] sm:$0xff]
  %v200 = vld [vmem:[%s1 + $0x370] sm:$0xff]
  %v201 = vld [vmem:[%s1 + $0x378] sm:$0xff]
  %v202 = vld [vmem:[%s2] sm:$0x3]
  %v204 = vperm.slane %v202, 0
  %v205 = vperm.slane %v202, 1
  %v272 = vunpack.c.l.b16 %v26
  %v273 = vunpack.c.h.b16 %v26
  %v274 = vunpack.c.l.b16 %v27
  %v275 = vunpack.c.h.b16 %v27
  %v276 = vunpack.c.l.b16 %v28
  %v277 = vunpack.c.h.b16 %v28
  %v278 = vunpack.c.l.b16 %v29
  %v279 = vunpack.c.l.b16 %v30
  %v280 = vunpack.c.h.b16 %v30
  %v281 = vunpack.c.l.b16 %v31
  %v282 = vunpack.c.h.b16 %v31
  %v283 = vunpack.c.l.b16 %v32
  %v284 = vunpack.c.h.b16 %v32
  %v285 = vunpack.c.l.b16 %v33
  %v286 = vunpack.c.l.b16 %v34
  %v287 = vunpack.c.h.b16 %v34
  %v288 = vunpack.c.l.b16 %v35
  %v289 = vunpack.c.h.b16 %v35
  %v290 = vunpack.c.l.b16 %v36
  %v291 = vunpack.c.h.b16 %v36
  %v292 = vunpack.c.l.b16 %v37
  %v293 = vunpack.c.l.b16 %v38
  %v294 = vunpack.c.h.b16 %v38
  %v295 = vunpack.c.l.b16 %v39
  %v296 = vunpack.c.h.b16 %v39
  %v297 = vunpack.c.l.b16 %v40
  %v298 = vunpack.c.h.b16 %v40
  %v299 = vunpack.c.l.b16 %v41
  %v300 = vunpack.c.l.b16 %v42
  %v301 = vunpack.c.h.b16 %v42
  %v302 = vunpack.c.l.b16 %v43
  %v303 = vunpack.c.h.b16 %v43
  %v304 = vunpack.c.l.b16 %v44
  %v305 = vunpack.c.h.b16 %v44
  %v306 = vunpack.c.l.b16 %v45
  %v307 = vunpack.c.l.b16 %v46
  %v308 = vunpack.c.h.b16 %v46
  %v309 = vunpack.c.l.b16 %v47
  %v310 = vunpack.c.h.b16 %v47
  %v311 = vunpack.c.l.b16 %v48
  %v312 = vunpack.c.h.b16 %v48
  %v313 = vunpack.c.l.b16 %v49
  %v314 = vunpack.c.l.b16 %v50
  %v315 = vunpack.c.h.b16 %v50
  %v316 = vunpack.c.l.b16 %v51
  %v317 = vunpack.c.h.b16 %v51
  %v318 = vunpack.c.l.b16 %v52
  %v319 = vunpack.c.h.b16 %v52
  %v320 = vunpack.c.l.b16 %v53
  %v321 = vunpack.c.l.b16 %v54
  %v322 = vunpack.c.h.b16 %v54
  %v323 = vunpack.c.l.b16 %v55
  %v324 = vunpack.c.h.b16 %v55
  %v325 = vunpack.c.l.b16 %v56
  %v326 = vunpack.c.h.b16 %v56
  %v327 = vunpack.c.l.b16 %v57
  %v328 = vunpack.c.l.b16 %v58
  %v329 = vunpack.c.h.b16 %v58
  %v330 = vunpack.c.l.b16 %v59
  %v331 = vunpack.c.h.b16 %v59
  %v332 = vunpack.c.l.b16 %v60
  %v333 = vunpack.c.h.b16 %v60
  %v334 = vunpack.c.l.b16 %v61
  %v335 = vunpack.c.l.b16 %v62
  %v336 = vunpack.c.h.b16 %v62
  %v337 = vunpack.c.l.b16 %v63
  %v338 = vunpack.c.h.b16 %v63
  %v339 = vunpack.c.l.b16 %v64
  %v340 = vunpack.c.h.b16 %v64
  %v341 = vunpack.c.l.b16 %v65
  %v342 = vunpack.c.l.b16 %v66
  %v343 = vunpack.c.h.b16 %v66
  %v344 = vunpack.c.l.b16 %v67
  %v345 = vunpack.c.h.b16 %v67
  %v346 = vunpack.c.l.b16 %v68
  %v347 = vunpack.c.h.b16 %v68
  %v348 = vunpack.c.l.b16 %v69
  %v349 = vunpack.c.l.b16 %v70
  %v350 = vunpack.c.h.b16 %v70
  %v351 = vunpack.c.l.b16 %v71
  %v352 = vunpack.c.h.b16 %v71
  %v353 = vunpack.c.l.b16 %v72
  %v354 = vunpack.c.h.b16 %v72
  %v355 = vunpack.c.l.b16 %v73
  %v356 = vunpack.c.l.b16 %v74
  %v357 = vunpack.c.h.b16 %v74
  %v358 = vunpack.c.l.b16 %v75
  %v359 = vunpack.c.h.b16 %v75
  %v360 = vunpack.c.l.b16 %v76
  %v361 = vunpack.c.h.b16 %v76
  %v362 = vunpack.c.l.b16 %v77
  %v363 = vunpack.c.l.b16 %v78
  %v364 = vunpack.c.h.b16 %v78
  %v365 = vunpack.c.l.b16 %v79
  %v366 = vunpack.c.h.b16 %v79
  %v367 = vunpack.c.l.b16 %v80
  %v368 = vunpack.c.h.b16 %v80
  %v369 = vunpack.c.l.b16 %v81
  %v370 = vunpack.c.l.b16 %v82
  %v371 = vunpack.c.h.b16 %v82
  %v372 = vunpack.c.l.b16 %v83
  %v373 = vunpack.c.h.b16 %v83
  %v374 = vunpack.c.l.b16 %v84
  %v375 = vunpack.c.h.b16 %v84
  %v376 = vunpack.c.l.b16 %v85
  %v377 = vunpack.c.l.b16 %v86
  %v378 = vunpack.c.h.b16 %v86
  %v379 = vunpack.c.l.b16 %v87
  %v380 = vunpack.c.h.b16 %v87
  %v381 = vunpack.c.l.b16 %v88
  %v382 = vunpack.c.h.b16 %v88
  %v383 = vunpack.c.l.b16 %v89
  %v384 = vpack.c.b16 %v279, %v272
  %v385 = vpack.c.b16 %v280, %v273
  %v386 = vpack.c.b16 %v281, %v274
  %v387 = vpack.c.b16 %v282, %v275
  %v388 = vpack.c.b16 %v283, %v276
  %v389 = vpack.c.b16 %v284, %v277
  %v390 = vpack.c.b16 %v285, %v278
  %v391 = vpack.c.b16 %v293, %v286
  %v392 = vpack.c.b16 %v294, %v287
  %v393 = vpack.c.b16 %v295, %v288
  %v394 = vpack.c.b16 %v296, %v289
  %v395 = vpack.c.b16 %v297, %v290
  %v396 = vpack.c.b16 %v298, %v291
  %v397 = vpack.c.b16 %v299, %v292
  %v398 = vpack.c.b16 %v307, %v300
  %v399 = vpack.c.b16 %v308, %v301
  %v400 = vpack.c.b16 %v309, %v302
  %v401 = vpack.c.b16 %v310, %v303
  %v402 = vpack.c.b16 %v311, %v304
  %v403 = vpack.c.b16 %v312, %v305
  %v404 = vpack.c.b16 %v313, %v306
  %v405 = vpack.c.b16 %v321, %v314
  %v406 = vpack.c.b16 %v322, %v315
  %v407 = vpack.c.b16 %v323, %v316
  %v408 = vpack.c.b16 %v324, %v317
  %v409 = vpack.c.b16 %v325, %v318
  %v410 = vpack.c.b16 %v326, %v319
  %v411 = vpack.c.b16 %v327, %v320
  %v412 = vpack.c.b16 %v335, %v328
  %v413 = vpack.c.b16 %v336, %v329
  %v414 = vpack.c.b16 %v337, %v330
  %v415 = vpack.c.b16 %v338, %v331
  %v416 = vpack.c.b16 %v339, %v332
  %v417 = vpack.c.b16 %v340, %v333
  %v418 = vpack.c.b16 %v341, %v334
  %v419 = vpack.c.b16 %v349, %v342
  %v420 = vpack.c.b16 %v350, %v343
  %v421 = vpack.c.b16 %v351, %v344
  %v422 = vpack.c.b16 %v352, %v345
  %v423 = vpack.c.b16 %v353, %v346
  %v424 = vpack.c.b16 %v354, %v347
  %v425 = vpack.c.b16 %v355, %v348
  %v426 = vpack.c.b16 %v363, %v356
  %v427 = vpack.c.b16 %v364, %v357
  %v428 = vpack.c.b16 %v365, %v358
  %v429 = vpack.c.b16 %v366, %v359
  %v430 = vpack.c.b16 %v367, %v360
  %v431 = vpack.c.b16 %v368, %v361
  %v432 = vpack.c.b16 %v369, %v362
  %v433 = vpack.c.b16 %v377, %v370
  %v434 = vpack.c.b16 %v378, %v371
  %v435 = vpack.c.b16 %v379, %v372
  %v436 = vpack.c.b16 %v380, %v373
  %v437 = vpack.c.b16 %v381, %v374
  %v438 = vpack.c.b16 %v382, %v375
  %v439 = vpack.c.b16 %v383, %v376
  %v608 = vunpack.c.l.b16 %v90
  %v609 = vunpack.c.h.b16 %v90
  %v610 = vunpack.c.l.b16 %v91
  %v611 = vunpack.c.h.b16 %v91
  %v612 = vunpack.c.l.b16 %v92
  %v613 = vunpack.c.h.b16 %v92
  %v614 = vunpack.c.l.b16 %v93
  %v615 = vunpack.c.h.b16 %v93
  %v616 = vunpack.c.l.b16 %v94
  %v617 = vunpack.c.h.b16 %v94
  %v618 = vunpack.c.l.b16 %v95
  %v619 = vunpack.c.h.b16 %v95
  %v620 = vunpack.c.l.b16 %v96
  %v621 = vunpack.c.h.b16 %v96
  %v622 = vunpack.c.l.b16 %v97
  %v623 = vunpack.c.h.b16 %v97
  %v624 = vunpack.c.l.b16 %v98
  %v625 = vunpack.c.h.b16 %v98
  %v626 = vunpack.c.l.b16 %v99
  %v627 = vunpack.c.h.b16 %v99
  %v628 = vunpack.c.l.b16 %v100
  %v629 = vunpack.c.h.b16 %v100
  %v630 = vunpack.c.l.b16 %v101
  %v631 = vunpack.c.h.b16 %v101
  %v632 = vunpack.c.l.b16 %v102
  %v633 = vunpack.c.h.b16 %v102
  %v634 = vunpack.c.l.b16 %v103
  %v635 = vunpack.c.h.b16 %v103
  %v636 = vunpack.c.l.b16 %v104
  %v637 = vunpack.c.h.b16 %v104
  %v638 = vunpack.c.l.b16 %v105
  %v639 = vunpack.c.h.b16 %v105
  %v640 = vunpack.c.l.b16 %v106
  %v641 = vunpack.c.h.b16 %v106
  %v642 = vunpack.c.l.b16 %v107
  %v643 = vunpack.c.h.b16 %v107
  %v644 = vunpack.c.l.b16 %v108
  %v645 = vunpack.c.h.b16 %v108
  %v646 = vunpack.c.l.b16 %v109
  %v647 = vunpack.c.h.b16 %v109
  %v648 = vunpack.c.l.b16 %v110
  %v649 = vunpack.c.h.b16 %v110
  %v650 = vunpack.c.l.b16 %v111
  %v651 = vunpack.c.h.b16 %v111
  %v652 = vunpack.c.l.b16 %v112
  %v653 = vunpack.c.h.b16 %v112
  %v654 = vunpack.c.l.b16 %v113
  %v655 = vunpack.c.h.b16 %v113
  %v656 = vunpack.c.l.b16 %v114
  %v657 = vunpack.c.h.b16 %v114
  %v658 = vunpack.c.l.b16 %v115
  %v659 = vunpack.c.h.b16 %v115
  %v660 = vunpack.c.l.b16 %v116
  %v661 = vunpack.c.h.b16 %v116
  %v662 = vunpack.c.l.b16 %v117
  %v663 = vunpack.c.h.b16 %v117
  %v664 = vunpack.c.l.b16 %v118
  %v665 = vunpack.c.h.b16 %v118
  %v666 = vunpack.c.l.b16 %v119
  %v667 = vunpack.c.h.b16 %v119
  %v668 = vunpack.c.l.b16 %v120
  %v669 = vunpack.c.h.b16 %v120
  %v670 = vunpack.c.l.b16 %v121
  %v671 = vunpack.c.h.b16 %v121
  %v672 = vunpack.c.l.b16 %v122
  %v673 = vunpack.c.h.b16 %v122
  %v674 = vunpack.c.l.b16 %v123
  %v675 = vunpack.c.h.b16 %v123
  %v676 = vunpack.c.l.b16 %v124
  %v677 = vunpack.c.h.b16 %v124
  %v678 = vunpack.c.l.b16 %v125
  %v679 = vunpack.c.h.b16 %v125
  %v680 = vunpack.c.l.b16 %v126
  %v681 = vunpack.c.h.b16 %v126
  %v682 = vunpack.c.l.b16 %v127
  %v683 = vunpack.c.h.b16 %v127
  %v684 = vunpack.c.l.b16 %v128
  %v685 = vunpack.c.h.b16 %v128
  %v686 = vunpack.c.l.b16 %v129
  %v687 = vunpack.c.h.b16 %v129
  %v688 = vunpack.c.l.b16 %v130
  %v689 = vunpack.c.h.b16 %v130
  %v690 = vunpack.c.l.b16 %v131
  %v691 = vunpack.c.h.b16 %v131
  %v692 = vunpack.c.l.b16 %v132
  %v693 = vunpack.c.h.b16 %v132
  %v694 = vunpack.c.l.b16 %v133
  %v695 = vunpack.c.h.b16 %v133
  %v696 = vunpack.c.l.b16 %v134
  %v697 = vunpack.c.h.b16 %v134
  %v698 = vunpack.c.l.b16 %v135
  %v699 = vunpack.c.h.b16 %v135
  %v700 = vunpack.c.l.b16 %v136
  %v701 = vunpack.c.h.b16 %v136
  %v702 = vunpack.c.l.b16 %v137
  %v703 = vunpack.c.h.b16 %v137
  %v704 = vunpack.c.l.b16 %v138
  %v705 = vunpack.c.h.b16 %v138
  %v706 = vunpack.c.l.b16 %v139
  %v707 = vunpack.c.h.b16 %v139
  %v708 = vunpack.c.l.b16 %v140
  %v709 = vunpack.c.h.b16 %v140
  %v710 = vunpack.c.l.b16 %v141
  %v711 = vunpack.c.h.b16 %v141
  %v712 = vunpack.c.l.b16 %v142
  %v713 = vunpack.c.h.b16 %v142
  %v714 = vunpack.c.l.b16 %v143
  %v715 = vunpack.c.h.b16 %v143
  %v716 = vunpack.c.l.b16 %v144
  %v717 = vunpack.c.h.b16 %v144
  %v718 = vunpack.c.l.b16 %v145
  %v719 = vunpack.c.h.b16 %v145
  %v720 = vunpack.c.l.b16 %v146
  %v721 = vunpack.c.h.b16 %v146
  %v722 = vunpack.c.l.b16 %v147
  %v723 = vunpack.c.h.b16 %v147
  %v724 = vunpack.c.l.b16 %v148
  %v725 = vunpack.c.h.b16 %v148
  %v726 = vunpack.c.l.b16 %v149
  %v727 = vunpack.c.h.b16 %v149
  %v728 = vunpack.c.l.b16 %v150
  %v729 = vunpack.c.h.b16 %v150
  %v730 = vunpack.c.l.b16 %v151
  %v731 = vunpack.c.h.b16 %v151
  %v732 = vunpack.c.l.b16 %v152
  %v733 = vunpack.c.h.b16 %v152
  %v734 = vunpack.c.l.b16 %v153
  %v735 = vunpack.c.h.b16 %v153
  %v736 = vunpack.c.l.b16 %v154
  %v737 = vunpack.c.h.b16 %v154
  %v738 = vunpack.c.l.b16 %v155
  %v739 = vunpack.c.h.b16 %v155
  %v740 = vunpack.c.l.b16 %v156
  %v741 = vunpack.c.h.b16 %v156
  %v742 = vunpack.c.l.b16 %v157
  %v743 = vunpack.c.h.b16 %v157
  %v744 = vunpack.c.l.b16 %v158
  %v745 = vunpack.c.h.b16 %v158
  %v746 = vunpack.c.l.b16 %v159
  %v747 = vunpack.c.h.b16 %v159
  %v748 = vunpack.c.l.b16 %v160
  %v749 = vunpack.c.h.b16 %v160
  %v750 = vunpack.c.l.b16 %v161
  %v751 = vunpack.c.h.b16 %v161
  %v752 = vunpack.c.l.b16 %v162
  %v753 = vunpack.c.h.b16 %v162
  %v754 = vunpack.c.l.b16 %v163
  %v755 = vunpack.c.h.b16 %v163
  %v756 = vunpack.c.l.b16 %v164
  %v757 = vunpack.c.h.b16 %v164
  %v758 = vunpack.c.l.b16 %v165
  %v759 = vunpack.c.h.b16 %v165
  %v760 = vunpack.c.l.b16 %v166
  %v761 = vunpack.c.h.b16 %v166
  %v762 = vunpack.c.l.b16 %v167
  %v763 = vunpack.c.h.b16 %v167
  %v764 = vunpack.c.l.b16 %v168
  %v765 = vunpack.c.h.b16 %v168
  %v766 = vunpack.c.l.b16 %v169
  %v767 = vunpack.c.h.b16 %v169
  %v768 = vunpack.c.l.b16 %v170
  %v769 = vunpack.c.h.b16 %v170
  %v770 = vunpack.c.l.b16 %v171
  %v771 = vunpack.c.h.b16 %v171
  %v772 = vunpack.c.l.b16 %v172
  %v773 = vunpack.c.h.b16 %v172
  %v774 = vunpack.c.l.b16 %v173
  %v775 = vunpack.c.h.b16 %v173
  %v776 = vunpack.c.l.b16 %v174
  %v777 = vunpack.c.h.b16 %v174
  %v778 = vunpack.c.l.b16 %v175
  %v779 = vunpack.c.h.b16 %v175
  %v780 = vunpack.c.l.b16 %v176
  %v781 = vunpack.c.h.b16 %v176
  %v782 = vunpack.c.l.b16 %v177
  %v783 = vunpack.c.h.b16 %v177
  %v784 = vunpack.c.l.b16 %v178
  %v785 = vunpack.c.h.b16 %v178
  %v786 = vunpack.c.l.b16 %v179
  %v787 = vunpack.c.h.b16 %v179
  %v788 = vunpack.c.l.b16 %v180
  %v789 = vunpack.c.h.b16 %v180
  %v790 = vunpack.c.l.b16 %v181
  %v791 = vunpack.c.h.b16 %v181
  %v792 = vunpack.c.l.b16 %v182
  %v793 = vunpack.c.h.b16 %v182
  %v794 = vunpack.c.l.b16 %v183
  %v795 = vunpack.c.h.b16 %v183
  %v796 = vunpack.c.l.b16 %v184
  %v797 = vunpack.c.h.b16 %v184
  %v798 = vunpack.c.l.b16 %v185
  %v799 = vunpack.c.h.b16 %v185
  %v800 = vunpack.c.l.b16 %v186
  %v801 = vunpack.c.h.b16 %v186
  %v802 = vunpack.c.l.b16 %v187
  %v803 = vunpack.c.h.b16 %v187
  %v804 = vunpack.c.l.b16 %v188
  %v805 = vunpack.c.h.b16 %v188
  %v806 = vunpack.c.l.b16 %v189
  %v807 = vunpack.c.h.b16 %v189
  %v808 = vunpack.c.l.b16 %v190
  %v809 = vunpack.c.h.b16 %v190
  %v810 = vunpack.c.l.b16 %v191
  %v811 = vunpack.c.h.b16 %v191
  %v812 = vunpack.c.l.b16 %v192
  %v813 = vunpack.c.h.b16 %v192
  %v814 = vunpack.c.l.b16 %v193
  %v815 = vunpack.c.h.b16 %v193
  %v816 = vunpack.c.l.b16 %v194
  %v817 = vunpack.c.h.b16 %v194
  %v818 = vunpack.c.l.b16 %v195
  %v819 = vunpack.c.h.b16 %v195
  %v820 = vunpack.c.l.b16 %v196
  %v821 = vunpack.c.h.b16 %v196
  %v822 = vunpack.c.l.b16 %v197
  %v823 = vunpack.c.h.b16 %v197
  %v824 = vunpack.c.l.b16 %v198
  %v825 = vunpack.c.h.b16 %v198
  %v826 = vunpack.c.l.b16 %v199
  %v827 = vunpack.c.h.b16 %v199
  %v828 = vunpack.c.l.b16 %v200
  %v829 = vunpack.c.h.b16 %v200
  %v830 = vunpack.c.l.b16 %v201
  %v831 = vunpack.c.h.b16 %v201
  %v832 = vpack.c.b16 %v610, %v608
  %v833 = vpack.c.b16 %v611, %v609
  %v834 = vpack.c.b16 %v614, %v612
  %v835 = vpack.c.b16 %v615, %v613
  %v836 = vpack.c.b16 %v618, %v616
  %v837 = vpack.c.b16 %v619, %v617
  %v838 = vpack.c.b16 %v622, %v620
  %v839 = vpack.c.b16 %v623, %v621
  %v840 = vpack.c.b16 %v626, %v624
  %v841 = vpack.c.b16 %v627, %v625
  %v842 = vpack.c.b16 %v630, %v628
  %v843 = vpack.c.b16 %v631, %v629
  %v844 = vpack.c.b16 %v634, %v632
  %v845 = vpack.c.b16 %v635, %v633
  %v846 = vpack.c.b16 %v638, %v636
  %v847 = vpack.c.b16 %v639, %v637
  %v848 = vpack.c.b16 %v642, %v640
  %v849 = vpack.c.b16 %v643, %v641
  %v850 = vpack.c.b16 %v646, %v644
  %v851 = vpack.c.b16 %v647, %v645
  %v852 = vpack.c.b16 %v650, %v648
  %v853 = vpack.c.b16 %v651, %v649
  %v854 = vpack.c.b16 %v654, %v652
  %v855 = vpack.c.b16 %v655, %v653
  %v856 = vpack.c.b16 %v658, %v656
  %v857 = vpack.c.b16 %v659, %v657
  %v858 = vpack.c.b16 %v662, %v660
  %v859 = vpack.c.b16 %v663, %v661
  %v860 = vpack.c.b16 %v666, %v664
  %v861 = vpack.c.b16 %v667, %v665
  %v862 = vpack.c.b16 %v670, %v668
  %v863 = vpack.c.b16 %v671, %v669
  %v864 = vpack.c.b16 %v674, %v672
  %v865 = vpack.c.b16 %v675, %v673
  %v866 = vpack.c.b16 %v678, %v676
  %v867 = vpack.c.b16 %v679, %v677
  %v868 = vpack.c.b16 %v682, %v680
  %v869 = vpack.c.b16 %v683, %v681
  %v870 = vpack.c.b16 %v686, %v684
  %v871 = vpack.c.b16 %v687, %v685
  %v872 = vpack.c.b16 %v690, %v688
  %v873 = vpack.c.b16 %v691, %v689
  %v874 = vpack.c.b16 %v694, %v692
  %v875 = vpack.c.b16 %v695, %v693
  %v876 = vpack.c.b16 %v698, %v696
  %v877 = vpack.c.b16 %v699, %v697
  %v878 = vpack.c.b16 %v702, %v700
  %v879 = vpack.c.b16 %v703, %v701
  %v880 = vpack.c.b16 %v706, %v704
  %v881 = vpack.c.b16 %v707, %v705
  %v882 = vpack.c.b16 %v710, %v708
  %v883 = vpack.c.b16 %v711, %v709
  %v884 = vpack.c.b16 %v714, %v712
  %v885 = vpack.c.b16 %v715, %v713
  %v886 = vpack.c.b16 %v718, %v716
  %v887 = vpack.c.b16 %v719, %v717
  %v888 = vpack.c.b16 %v722, %v720
  %v889 = vpack.c.b16 %v723, %v721
  %v890 = vpack.c.b16 %v726, %v724
  %v891 = vpack.c.b16 %v727, %v725
  %v892 = vpack.c.b16 %v730, %v728
  %v893 = vpack.c.b16 %v731, %v729
  %v894 = vpack.c.b16 %v734, %v732
  %v895 = vpack.c.b16 %v735, %v733
  %v896 = vpack.c.b16 %v738, %v736
  %v897 = vpack.c.b16 %v739, %v737
  %v898 = vpack.c.b16 %v742, %v740
  %v899 = vpack.c.b16 %v743, %v741
  %v900 = vpack.c.b16 %v746, %v744
  %v901 = vpack.c.b16 %v747, %v745
  %v902 = vpack.c.b16 %v750, %v748
  %v903 = vpack.c.b16 %v751, %v749
  %v904 = vpack.c.b16 %v754, %v752
  %v905 = vpack.c.b16 %v755, %v753
  %v906 = vpack.c.b16 %v758, %v756
  %v907 = vpack.c.b16 %v759, %v757
  %v908 = vpack.c.b16 %v762, %v760
  %v909 = vpack.c.b16 %v763, %v761
  %v910 = vpack.c.b16 %v766, %v764
  %v911 = vpack.c.b16 %v767, %v765
  %v912 = vpack.c.b16 %v770, %v768
  %v913 = vpack.c.b16 %v771, %v769
  %v914 = vpack.c.b16 %v774, %v772
  %v915 = vpack.c.b16 %v775, %v773
  %v916 = vpack.c.b16 %v778, %v776
  %v917 = vpack.c.b16 %v779, %v777
  %v918 = vpack.c.b16 %v782, %v780
  %v919 = vpack.c.b16 %v783, %v781
  %v920 = vpack.c.b16 %v786, %v784
  %v921 = vpack.c.b16 %v787, %v785
  %v922 = vpack.c.b16 %v790, %v788
  %v923 = vpack.c.b16 %v791, %v789
  %v924 = vpack.c.b16 %v794, %v792
  %v925 = vpack.c.b16 %v795, %v793
  %v926 = vpack.c.b16 %v798, %v796
  %v927 = vpack.c.b16 %v799, %v797
  %v928 = vpack.c.b16 %v802, %v800
  %v929 = vpack.c.b16 %v803, %v801
  %v930 = vpack.c.b16 %v806, %v804
  %v931 = vpack.c.b16 %v807, %v805
  %v932 = vpack.c.b16 %v810, %v808
  %v933 = vpack.c.b16 %v811, %v809
  %v934 = vpack.c.b16 %v814, %v812
  %v935 = vpack.c.b16 %v815, %v813
  %v936 = vpack.c.b16 %v818, %v816
  %v937 = vpack.c.b16 %v819, %v817
  %v938 = vpack.c.b16 %v822, %v820
  %v939 = vpack.c.b16 %v823, %v821
  %v940 = vpack.c.b16 %v826, %v824
  %v941 = vpack.c.b16 %v827, %v825
  %v942 = vpack.c.b16 %v830, %v828
  %v943 = vpack.c.b16 %v831, %v829
  %1056 = vmatpush.bf16.msra.mxu0 %v846
  %1057 = vmatpush.bf16.msra.mxu0 %v844
  %1058 = vmatpush.bf16.msra.mxu0 %v842
  %1059 = vmatpush.bf16.msra.mxu0 %v840
  %1060 = vmatpush.bf16.msra.mxu0 %v838
  %1061 = vmatpush.bf16.msra.mxu0 %v836
  %1062 = vmatpush.bf16.msra.mxu0 %v834
  %1063 = vmatpush.bf16.msra.mxu0 %v832
  %1064 = vmatmul.bf16.gmra.mxu0 %v384
  %v1065 = vpop.f32.mrf.mxu0
  %v1066 = vadd.f32 %v204, %v1065
  %v1067 = vpop.f32.mrf.mxu0
  %v1068 = vadd.f32 %v204, %v1067
  %1069 = vmatmul.bf16.gmra.mxu0 %v391
  %v1070 = vpop.f32.mrf.mxu0
  %v1071 = vadd.f32 %v204, %v1070
  %v1072 = vpop.f32.mrf.mxu0
  %v1073 = vadd.f32 %v204, %v1072
  %1074 = vmatmul.bf16.gmra.mxu0 %v398
  %v1075 = vpop.f32.mrf.mxu0
  %v1076 = vadd.f32 %v204, %v1075
  %v1077 = vpop.f32.mrf.mxu0
  %v1078 = vadd.f32 %v204, %v1077
  %1079 = vmatmul.bf16.gmra.mxu0 %v405
  %v1080 = vpop.f32.mrf.mxu0
  %v1081 = vadd.f32 %v204, %v1080
  %v1082 = vpop.f32.mrf.mxu0
  %v1083 = vadd.f32 %v204, %v1082
  %1084 = vmatmul.bf16.gmra.mxu0 %v412
  %v1085 = vpop.f32.mrf.mxu0
  %v1086 = vadd.f32 %v204, %v1085
  %v1087 = vpop.f32.mrf.mxu0
  %v1088 = vadd.f32 %v204, %v1087
  %1089 = vmatmul.bf16.gmra.mxu0 %v419
  %v1090 = vpop.f32.mrf.mxu0
  %v1091 = vadd.f32 %v204, %v1090
  %v1092 = vpop.f32.mrf.mxu0
  %v1093 = vadd.f32 %v204, %v1092
  %1094 = vmatmul.bf16.gmra.mxu0 %v426
  %v1095 = vpop.f32.mrf.mxu0
  %v1096 = vadd.f32 %v204, %v1095
  %v1097 = vpop.f32.mrf.mxu0
  %v1098 = vadd.f32 %v204, %v1097
  %1099 = vmatmul.bf16.gmra.mxu0 %v433
  %v1100 = vpop.f32.mrf.mxu0
  %v1101 = vadd.f32 %v204, %v1100
  %v1102 = vpop.f32.mrf.mxu0
  %v1103 = vadd.f32 %v204, %v1102
  %1104 = vdwg.mxu0
  %1105 = vmatpush.bf16.msra.mxu0 %v862
  %1106 = vmatpush.bf16.msra.mxu0 %v860
  %1107 = vmatpush.bf16.msra.mxu0 %v858
  %1108 = vmatpush.bf16.msra.mxu0 %v856
  %1109 = vmatpush.bf16.msra.mxu0 %v854
  %1110 = vmatpush.bf16.msra.mxu0 %v852
  %1111 = vmatpush.bf16.msra.mxu0 %v850
  %1112 = vmatpush.bf16.msra.mxu0 %v848
  %1113 = vmatmul.bf16.gmra.mxu0 %v385
  %v1114 = vpop.f32.mrf.mxu0
  %v1115 = vadd.f32 %v1066, %v1114
  %v1116 = vpop.f32.mrf.mxu0
  %v1117 = vadd.f32 %v1068, %v1116
  %1118 = vmatmul.bf16.gmra.mxu0 %v392
  %v1119 = vpop.f32.mrf.mxu0
  %v1120 = vadd.f32 %v1071, %v1119
  %v1121 = vpop.f32.mrf.mxu0
  %v1122 = vadd.f32 %v1073, %v1121
  %1123 = vmatmul.bf16.gmra.mxu0 %v399
  %v1124 = vpop.f32.mrf.mxu0
  %v1125 = vadd.f32 %v1076, %v1124
  %v1126 = vpop.f32.mrf.mxu0
  %v1127 = vadd.f32 %v1078, %v1126
  %1128 = vmatmul.bf16.gmra.mxu0 %v406
  %v1129 = vpop.f32.mrf.mxu0
  %v1130 = vadd.f32 %v1081, %v1129
  %v1131 = vpop.f32.mrf.mxu0
  %v1132 = vadd.f32 %v1083, %v1131
  %1133 = vmatmul.bf16.gmra.mxu0 %v413
  %v1134 = vpop.f32.mrf.mxu0
  %v1135 = vadd.f32 %v1086, %v1134
  %v1136 = vpop.f32.mrf.mxu0
  %v1137 = vadd.f32 %v1088, %v1136
  %1138 = vmatmul.bf16.gmra.mxu0 %v420
  %v1139 = vpop.f32.mrf.mxu0
  %v1140 = vadd.f32 %v1091, %v1139
  %v1141 = vpop.f32.mrf.mxu0
  %v1142 = vadd.f32 %v1093, %v1141
  %1143 = vmatmul.bf16.gmra.mxu0 %v427
  %v1144 = vpop.f32.mrf.mxu0
  %v1145 = vadd.f32 %v1096, %v1144
  %v1146 = vpop.f32.mrf.mxu0
  %v1147 = vadd.f32 %v1098, %v1146
  %1148 = vmatmul.bf16.gmra.mxu0 %v434
  %v1149 = vpop.f32.mrf.mxu0
  %v1150 = vadd.f32 %v1101, %v1149
  %v1151 = vpop.f32.mrf.mxu0
  %v1152 = vadd.f32 %v1103, %v1151
  %1153 = vdwg.mxu0
  %1154 = vmatpush.bf16.msra.mxu0 %v878
  %1155 = vmatpush.bf16.msra.mxu0 %v876
  %1156 = vmatpush.bf16.msra.mxu0 %v874
  %1157 = vmatpush.bf16.msra.mxu0 %v872
  %1158 = vmatpush.bf16.msra.mxu0 %v870
  %1159 = vmatpush.bf16.msra.mxu0 %v868
  %1160 = vmatpush.bf16.msra.mxu0 %v866
  %1161 = vmatpush.bf16.msra.mxu0 %v864
  %1162 = vmatmul.bf16.gmra.mxu0 %v386
  %v1163 = vpop.f32.mrf.mxu0
  %v1164 = vadd.f32 %v1115, %v1163
  %v1165 = vpop.f32.mrf.mxu0
  %v1166 = vadd.f32 %v1117, %v1165
  %1167 = vmatmul.bf16.gmra.mxu0 %v393
  %v1168 = vpop.f32.mrf.mxu0
  %v1169 = vadd.f32 %v1120, %v1168
  %v1170 = vpop.f32.mrf.mxu0
  %v1171 = vadd.f32 %v1122, %v1170
  %1172 = vmatmul.bf16.gmra.mxu0 %v400
  %v1173 = vpop.f32.mrf.mxu0
  %v1174 = vadd.f32 %v1125, %v1173
  %v1175 = vpop.f32.mrf.mxu0
  %v1176 = vadd.f32 %v1127, %v1175
  %1177 = vmatmul.bf16.gmra.mxu0 %v407
  %v1178 = vpop.f32.mrf.mxu0
  %v1179 = vadd.f32 %v1130, %v1178
  %v1180 = vpop.f32.mrf.mxu0
  %v1181 = vadd.f32 %v1132, %v1180
  %1182 = vmatmul.bf16.gmra.mxu0 %v414
  %v1183 = vpop.f32.mrf.mxu0
  %v1184 = vadd.f32 %v1135, %v1183
  %v1185 = vpop.f32.mrf.mxu0
  %v1186 = vadd.f32 %v1137, %v1185
  %1187 = vmatmul.bf16.gmra.mxu0 %v421
  %v1188 = vpop.f32.mrf.mxu0
  %v1189 = vadd.f32 %v1140, %v1188
  %v1190 = vpop.f32.mrf.mxu0
  %v1191 = vadd.f32 %v1142, %v1190
  %1192 = vmatmul.bf16.gmra.mxu0 %v428
  %v1193 = vpop.f32.mrf.mxu0
  %v1194 = vadd.f32 %v1145, %v1193
  %v1195 = vpop.f32.mrf.mxu0
  %v1196 = vadd.f32 %v1147, %v1195
  %1197 = vmatmul.bf16.gmra.mxu0 %v435
  %v1198 = vpop.f32.mrf.mxu0
  %v1199 = vadd.f32 %v1150, %v1198
  %v1200 = vpop.f32.mrf.mxu0
  %v1201 = vadd.f32 %v1152, %v1200
  %1202 = vdwg.mxu0
  %1203 = vmatpush.bf16.msra.mxu0 %v894
  %1204 = vmatpush.bf16.msra.mxu0 %v892
  %1205 = vmatpush.bf16.msra.mxu0 %v890
  %1206 = vmatpush.bf16.msra.mxu0 %v888
  %1207 = vmatpush.bf16.msra.mxu0 %v886
  %1208 = vmatpush.bf16.msra.mxu0 %v884
  %1209 = vmatpush.bf16.msra.mxu0 %v882
  %1210 = vmatpush.bf16.msra.mxu0 %v880
  %1211 = vmatmul.bf16.gmra.mxu0 %v387
  %v1212 = vpop.f32.mrf.mxu0
  %v1213 = vadd.f32 %v1164, %v1212
  %v1214 = vpop.f32.mrf.mxu0
  %v1215 = vadd.f32 %v1166, %v1214
  %1216 = vmatmul.bf16.gmra.mxu0 %v394
  %v1217 = vpop.f32.mrf.mxu0
  %v1218 = vadd.f32 %v1169, %v1217
  %v1219 = vpop.f32.mrf.mxu0
  %v1220 = vadd.f32 %v1171, %v1219
  %1221 = vmatmul.bf16.gmra.mxu0 %v401
  %v1222 = vpop.f32.mrf.mxu0
  %v1223 = vadd.f32 %v1174, %v1222
  %v1224 = vpop.f32.mrf.mxu0
  %v1225 = vadd.f32 %v1176, %v1224
  %1226 = vmatmul.bf16.gmra.mxu0 %v408
  %v1227 = vpop.f32.mrf.mxu0
  %v1228 = vadd.f32 %v1179, %v1227
  %v1229 = vpop.f32.mrf.mxu0
  %v1230 = vadd.f32 %v1181, %v1229
  %1231 = vmatmul.bf16.gmra.mxu0 %v415
  %v1232 = vpop.f32.mrf.mxu0
  %v1233 = vadd.f32 %v1184, %v1232
  %v1234 = vpop.f32.mrf.mxu0
  %v1235 = vadd.f32 %v1186, %v1234
  %1236 = vmatmul.bf16.gmra.mxu0 %v422
  %v1237 = vpop.f32.mrf.mxu0
  %v1238 = vadd.f32 %v1189, %v1237
  %v1239 = vpop.f32.mrf.mxu0
  %v1240 = vadd.f32 %v1191, %v1239
  %1241 = vmatmul.bf16.gmra.mxu0 %v429
  %v1242 = vpop.f32.mrf.mxu0
  %v1243 = vadd.f32 %v1194, %v1242
  %v1244 = vpop.f32.mrf.mxu0
  %v1245 = vadd.f32 %v1196, %v1244
  %1246 = vmatmul.bf16.gmra.mxu0 %v436
  %v1247 = vpop.f32.mrf.mxu0
  %v1248 = vadd.f32 %v1199, %v1247
  %v1249 = vpop.f32.mrf.mxu0
  %v1250 = vadd.f32 %v1201, %v1249
  %1251 = vdwg.mxu0
  %1252 = vmatpush.bf16.msra.mxu0 %v910
  %1253 = vmatpush.bf16.msra.mxu0 %v908
  %1254 = vmatpush.bf16.msra.mxu0 %v906
  %1255 = vmatpush.bf16.msra.mxu0 %v904
  %1256 = vmatpush.bf16.msra.mxu0 %v902
  %1257 = vmatpush.bf16.msra.mxu0 %v900
  %1258 = vmatpush.bf16.msra.mxu0 %v898
  %1259 = vmatpush.bf16.msra.mxu0 %v896
  %1260 = vmatmul.bf16.gmra.mxu0 %v388
  %v1261 = vpop.f32.mrf.mxu0
  %v1262 = vadd.f32 %v1213, %v1261
  %v1263 = vpop.f32.mrf.mxu0
  %v1264 = vadd.f32 %v1215, %v1263
  %1265 = vmatmul.bf16.gmra.mxu0 %v395
  %v1266 = vpop.f32.mrf.mxu0
  %v1267 = vadd.f32 %v1218, %v1266
  %v1268 = vpop.f32.mrf.mxu0
  %v1269 = vadd.f32 %v1220, %v1268
  %1270 = vmatmul.bf16.gmra.mxu0 %v402
  %v1271 = vpop.f32.mrf.mxu0
  %v1272 = vadd.f32 %v1223, %v1271
  %v1273 = vpop.f32.mrf.mxu0
  %v1274 = vadd.f32 %v1225, %v1273
  %1275 = vmatmul.bf16.gmra.mxu0 %v409
  %v1276 = vpop.f32.mrf.mxu0
  %v1277 = vadd.f32 %v1228, %v1276
  %v1278 = vpop.f32.mrf.mxu0
  %v1279 = vadd.f32 %v1230, %v1278
  %1280 = vmatmul.bf16.gmra.mxu0 %v416
  %v1281 = vpop.f32.mrf.mxu0
  %v1282 = vadd.f32 %v1233, %v1281
  %v1283 = vpop.f32.mrf.mxu0
  %v1284 = vadd.f32 %v1235, %v1283
  %1285 = vmatmul.bf16.gmra.mxu0 %v423
  %v1286 = vpop.f32.mrf.mxu0
  %v1287 = vadd.f32 %v1238, %v1286
  %v1288 = vpop.f32.mrf.mxu0
  %v1289 = vadd.f32 %v1240, %v1288
  %1290 = vmatmul.bf16.gmra.mxu0 %v430
  %v1291 = vpop.f32.mrf.mxu0
  %v1292 = vadd.f32 %v1243, %v1291
  %v1293 = vpop.f32.mrf.mxu0
  %v1294 = vadd.f32 %v1245, %v1293
  %1295 = vmatmul.bf16.gmra.mxu0 %v437
  %v1296 = vpop.f32.mrf.mxu0
  %v1297 = vadd.f32 %v1248, %v1296
  %v1298 = vpop.f32.mrf.mxu0
  %v1299 = vadd.f32 %v1250, %v1298
  %1300 = vdwg.mxu0
  %1301 = vmatpush.bf16.msra.mxu0 %v926
  %1302 = vmatpush.bf16.msra.mxu0 %v924
  %1303 = vmatpush.bf16.msra.mxu0 %v922
  %1304 = vmatpush.bf16.msra.mxu0 %v920
  %1305 = vmatpush.bf16.msra.mxu0 %v918
  %1306 = vmatpush.bf16.msra.mxu0 %v916
  %1307 = vmatpush.bf16.msra.mxu0 %v914
  %1308 = vmatpush.bf16.msra.mxu0 %v912
  %1309 = vmatmul.bf16.gmra.mxu0 %v389
  %v1310 = vpop.f32.mrf.mxu0
  %v1311 = vadd.f32 %v1262, %v1310
  %v1312 = vpop.f32.mrf.mxu0
  %v1313 = vadd.f32 %v1264, %v1312
  %1314 = vmatmul.bf16.gmra.mxu0 %v396
  %v1315 = vpop.f32.mrf.mxu0
  %v1316 = vadd.f32 %v1267, %v1315
  %v1317 = vpop.f32.mrf.mxu0
  %v1318 = vadd.f32 %v1269, %v1317
  %1319 = vmatmul.bf16.gmra.mxu0 %v403
  %v1320 = vpop.f32.mrf.mxu0
  %v1321 = vadd.f32 %v1272, %v1320
  %v1322 = vpop.f32.mrf.mxu0
  %v1323 = vadd.f32 %v1274, %v1322
  %1324 = vmatmul.bf16.gmra.mxu0 %v410
  %v1325 = vpop.f32.mrf.mxu0
  %v1326 = vadd.f32 %v1277, %v1325
  %v1327 = vpop.f32.mrf.mxu0
  %v1328 = vadd.f32 %v1279, %v1327
  %1329 = vmatmul.bf16.gmra.mxu0 %v417
  %v1330 = vpop.f32.mrf.mxu0
  %v1331 = vadd.f32 %v1282, %v1330
  %v1332 = vpop.f32.mrf.mxu0
  %v1333 = vadd.f32 %v1284, %v1332
  %1334 = vmatmul.bf16.gmra.mxu0 %v424
  %v1335 = vpop.f32.mrf.mxu0
  %v1336 = vadd.f32 %v1287, %v1335
  %v1337 = vpop.f32.mrf.mxu0
  %v1338 = vadd.f32 %v1289, %v1337
  %1339 = vmatmul.bf16.gmra.mxu0 %v431
  %v1340 = vpop.f32.mrf.mxu0
  %v1341 = vadd.f32 %v1292, %v1340
  %v1342 = vpop.f32.mrf.mxu0
  %v1343 = vadd.f32 %v1294, %v1342
  %1344 = vmatmul.bf16.gmra.mxu0 %v438
  %v1345 = vpop.f32.mrf.mxu0
  %v1346 = vadd.f32 %v1297, %v1345
  %v1347 = vpop.f32.mrf.mxu0
  %v1348 = vadd.f32 %v1299, %v1347
  %1349 = vdwg.mxu0
  %1350 = vmatpush.bf16.msra.mxu0 %v942
  %1351 = vmatpush.bf16.msra.mxu0 %v940
  %1352 = vmatpush.bf16.msra.mxu0 %v938
  %1353 = vmatpush.bf16.msra.mxu0 %v936
  %1354 = vmatpush.bf16.msra.mxu0 %v934
  %1355 = vmatpush.bf16.msra.mxu0 %v932
  %1356 = vmatpush.bf16.msra.mxu0 %v930
  %1357 = vmatpush.bf16.msra.mxu0 %v928
  %1358 = vmatmul.bf16.gmra.mxu0 %v390
  %v1359 = vpop.f32.mrf.mxu0
  %v1360 = vadd.f32 %v1311, %v1359
  %v1361 = vpop.f32.mrf.mxu0
  %v1362 = vadd.f32 %v1313, %v1361
  %1363 = vmatmul.bf16.gmra.mxu0 %v397
  %v1364 = vpop.f32.mrf.mxu0
  %v1365 = vadd.f32 %v1316, %v1364
  %v1366 = vpop.f32.mrf.mxu0
  %v1367 = vadd.f32 %v1318, %v1366
  %1368 = vmatmul.bf16.gmra.mxu0 %v404
  %v1369 = vpop.f32.mrf.mxu0
  %v1370 = vadd.f32 %v1321, %v1369
  %v1371 = vpop.f32.mrf.mxu0
  %v1372 = vadd.f32 %v1323, %v1371
  %1373 = vmatmul.bf16.gmra.mxu0 %v411
  %v1374 = vpop.f32.mrf.mxu0
  %v1375 = vadd.f32 %v1326, %v1374
  %v1376 = vpop.f32.mrf.mxu0
  %v1377 = vadd.f32 %v1328, %v1376
  %1378 = vmatmul.bf16.gmra.mxu0 %v418
  %v1379 = vpop.f32.mrf.mxu0
  %v1380 = vadd.f32 %v1331, %v1379
  %v1381 = vpop.f32.mrf.mxu0
  %v1382 = vadd.f32 %v1333, %v1381
  %1383 = vmatmul.bf16.gmra.mxu0 %v425
  %v1384 = vpop.f32.mrf.mxu0
  %v1385 = vadd.f32 %v1336, %v1384
  %v1386 = vpop.f32.mrf.mxu0
  %v1387 = vadd.f32 %v1338, %v1386
  %1388 = vmatmul.bf16.gmra.mxu0 %v432
  %v1389 = vpop.f32.mrf.mxu0
  %v1390 = vadd.f32 %v1341, %v1389
  %v1391 = vpop.f32.mrf.mxu0
  %v1392 = vadd.f32 %v1343, %v1391
  %1393 = vmatmul.bf16.gmra.mxu0 %v439
  %v1394 = vpop.f32.mrf.mxu0
  %v1395 = vadd.f32 %v1346, %v1394
  %v1396 = vpop.f32.mrf.mxu0
  %v1397 = vadd.f32 %v1348, %v1396
  %1398 = vdwg.mxu0
  %1399 = vmatpush.bf16.msra.mxu0 %v847
  %1400 = vmatpush.bf16.msra.mxu0 %v845
  %1401 = vmatpush.bf16.msra.mxu0 %v843
  %1402 = vmatpush.bf16.msra.mxu0 %v841
  %1403 = vmatpush.bf16.msra.mxu0 %v839
  %1404 = vmatpush.bf16.msra.mxu0 %v837
  %1405 = vmatpush.bf16.msra.mxu0 %v835
  %1406 = vmatpush.bf16.msra.mxu0 %v833
  %1407 = vmatmul.bf16.gmra.mxu0 %v384
  %v1408 = vpop.f32.mrf.mxu0
  %v1409 = vadd.f32 %v205, %v1408
  %v1410 = vpop.f32.mrf.mxu0
  %v1411 = vadd.f32 %v205, %v1410
  %1412 = vmatmul.bf16.gmra.mxu0 %v391
  %v1413 = vpop.f32.mrf.mxu0
  %v1414 = vadd.f32 %v205, %v1413
  %v1415 = vpop.f32.mrf.mxu0
  %v1416 = vadd.f32 %v205, %v1415
  %1417 = vmatmul.bf16.gmra.mxu0 %v398
  %v1418 = vpop.f32.mrf.mxu0
  %v1419 = vadd.f32 %v205, %v1418
  %v1420 = vpop.f32.mrf.mxu0
  %v1421 = vadd.f32 %v205, %v1420
  %1422 = vmatmul.bf16.gmra.mxu0 %v405
  %v1423 = vpop.f32.mrf.mxu0
  %v1424 = vadd.f32 %v205, %v1423
  %v1425 = vpop.f32.mrf.mxu0
  %v1426 = vadd.f32 %v205, %v1425
  %1427 = vmatmul.bf16.gmra.mxu0 %v412
  %v1428 = vpop.f32.mrf.mxu0
  %v1429 = vadd.f32 %v205, %v1428
  %v1430 = vpop.f32.mrf.mxu0
  %v1431 = vadd.f32 %v205, %v1430
  %1432 = vmatmul.bf16.gmra.mxu0 %v419
  %v1433 = vpop.f32.mrf.mxu0
  %v1434 = vadd.f32 %v205, %v1433
  %v1435 = vpop.f32.mrf.mxu0
  %v1436 = vadd.f32 %v205, %v1435
  %1437 = vmatmul.bf16.gmra.mxu0 %v426
  %v1438 = vpop.f32.mrf.mxu0
  %v1439 = vadd.f32 %v205, %v1438
  %v1440 = vpop.f32.mrf.mxu0
  %v1441 = vadd.f32 %v205, %v1440
  %1442 = vmatmul.bf16.gmra.mxu0 %v433
  %v1443 = vpop.f32.mrf.mxu0
  %v1444 = vadd.f32 %v205, %v1443
  %v1445 = vpop.f32.mrf.mxu0
  %v1446 = vadd.f32 %v205, %v1445
  %1447 = vdwg.mxu0
  %1448 = vmatpush.bf16.msra.mxu0 %v863
  %1449 = vmatpush.bf16.msra.mxu0 %v861
  %1450 = vmatpush.bf16.msra.mxu0 %v859
  %1451 = vmatpush.bf16.msra.mxu0 %v857
  %1452 = vmatpush.bf16.msra.mxu0 %v855
  %1453 = vmatpush.bf16.msra.mxu0 %v853
  %1454 = vmatpush.bf16.msra.mxu0 %v851
  %1455 = vmatpush.bf16.msra.mxu0 %v849
  %1456 = vmatmul.bf16.gmra.mxu0 %v385
  %v1457 = vpop.f32.mrf.mxu0
  %v1458 = vadd.f32 %v1409, %v1457
  %v1459 = vpop.f32.mrf.mxu0
  %v1460 = vadd.f32 %v1411, %v1459
  %1461 = vmatmul.bf16.gmra.mxu0 %v392
  %v1462 = vpop.f32.mrf.mxu0
  %v1463 = vadd.f32 %v1414, %v1462
  %v1464 = vpop.f32.mrf.mxu0
  %v1465 = vadd.f32 %v1416, %v1464
  %1466 = vmatmul.bf16.gmra.mxu0 %v399
  %v1467 = vpop.f32.mrf.mxu0
  %v1468 = vadd.f32 %v1419, %v1467
  %v1469 = vpop.f32.mrf.mxu0
  %v1470 = vadd.f32 %v1421, %v1469
  %1471 = vmatmul.bf16.gmra.mxu0 %v406
  %v1472 = vpop.f32.mrf.mxu0
  %v1473 = vadd.f32 %v1424, %v1472
  %v1474 = vpop.f32.mrf.mxu0
  %v1475 = vadd.f32 %v1426, %v1474
  %1476 = vmatmul.bf16.gmra.mxu0 %v413
  %v1477 = vpop.f32.mrf.mxu0
  %v1478 = vadd.f32 %v1429, %v1477
  %v1479 = vpop.f32.mrf.mxu0
  %v1480 = vadd.f32 %v1431, %v1479
  %1481 = vmatmul.bf16.gmra.mxu0 %v420
  %v1482 = vpop.f32.mrf.mxu0
  %v1483 = vadd.f32 %v1434, %v1482
  %v1484 = vpop.f32.mrf.mxu0
  %v1485 = vadd.f32 %v1436, %v1484
  %1486 = vmatmul.bf16.gmra.mxu0 %v427
  %v1487 = vpop.f32.mrf.mxu0
  %v1488 = vadd.f32 %v1439, %v1487
  %v1489 = vpop.f32.mrf.mxu0
  %v1490 = vadd.f32 %v1441, %v1489
  %1491 = vmatmul.bf16.gmra.mxu0 %v434
  %v1492 = vpop.f32.mrf.mxu0
  %v1493 = vadd.f32 %v1444, %v1492
  %v1494 = vpop.f32.mrf.mxu0
  %v1495 = vadd.f32 %v1446, %v1494
  %1496 = vdwg.mxu0
  %1497 = vmatpush.bf16.msra.mxu0 %v879
  %1498 = vmatpush.bf16.msra.mxu0 %v877
  %1499 = vmatpush.bf16.msra.mxu0 %v875
  %1500 = vmatpush.bf16.msra.mxu0 %v873
  %1501 = vmatpush.bf16.msra.mxu0 %v871
  %1502 = vmatpush.bf16.msra.mxu0 %v869
  %1503 = vmatpush.bf16.msra.mxu0 %v867
  %1504 = vmatpush.bf16.msra.mxu0 %v865
  %1505 = vmatmul.bf16.gmra.mxu0 %v386
  %v1506 = vpop.f32.mrf.mxu0
  %v1507 = vadd.f32 %v1458, %v1506
  %v1508 = vpop.f32.mrf.mxu0
  %v1509 = vadd.f32 %v1460, %v1508
  %1510 = vmatmul.bf16.gmra.mxu0 %v393
  %v1511 = vpop.f32.mrf.mxu0
  %v1512 = vadd.f32 %v1463, %v1511
  %v1513 = vpop.f32.mrf.mxu0
  %v1514 = vadd.f32 %v1465, %v1513
  %1515 = vmatmul.bf16.gmra.mxu0 %v400
  %v1516 = vpop.f32.mrf.mxu0
  %v1517 = vadd.f32 %v1468, %v1516
  %v1518 = vpop.f32.mrf.mxu0
  %v1519 = vadd.f32 %v1470, %v1518
  %1520 = vmatmul.bf16.gmra.mxu0 %v407
  %v1521 = vpop.f32.mrf.mxu0
  %v1522 = vadd.f32 %v1473, %v1521
  %v1523 = vpop.f32.mrf.mxu0
  %v1524 = vadd.f32 %v1475, %v1523
  %1525 = vmatmul.bf16.gmra.mxu0 %v414
  %v1526 = vpop.f32.mrf.mxu0
  %v1527 = vadd.f32 %v1478, %v1526
  %v1528 = vpop.f32.mrf.mxu0
  %v1529 = vadd.f32 %v1480, %v1528
  %1530 = vmatmul.bf16.gmra.mxu0 %v421
  %v1531 = vpop.f32.mrf.mxu0
  %v1532 = vadd.f32 %v1483, %v1531
  %v1533 = vpop.f32.mrf.mxu0
  %v1534 = vadd.f32 %v1485, %v1533
  %1535 = vmatmul.bf16.gmra.mxu0 %v428
  %v1536 = vpop.f32.mrf.mxu0
  %v1537 = vadd.f32 %v1488, %v1536
  %v1538 = vpop.f32.mrf.mxu0
  %v1539 = vadd.f32 %v1490, %v1538
  %1540 = vmatmul.bf16.gmra.mxu0 %v435
  %v1541 = vpop.f32.mrf.mxu0
  %v1542 = vadd.f32 %v1493, %v1541
  %v1543 = vpop.f32.mrf.mxu0
  %v1544 = vadd.f32 %v1495, %v1543
  %1545 = vdwg.mxu0
  %1546 = vmatpush.bf16.msra.mxu0 %v895
  %1547 = vmatpush.bf16.msra.mxu0 %v893
  %1548 = vmatpush.bf16.msra.mxu0 %v891
  %1549 = vmatpush.bf16.msra.mxu0 %v889
  %1550 = vmatpush.bf16.msra.mxu0 %v887
  %1551 = vmatpush.bf16.msra.mxu0 %v885
  %1552 = vmatpush.bf16.msra.mxu0 %v883
  %1553 = vmatpush.bf16.msra.mxu0 %v881
  %1554 = vmatmul.bf16.gmra.mxu0 %v387
  %v1555 = vpop.f32.mrf.mxu0
  %v1556 = vadd.f32 %v1507, %v1555
  %v1557 = vpop.f32.mrf.mxu0
  %v1558 = vadd.f32 %v1509, %v1557
  %1559 = vmatmul.bf16.gmra.mxu0 %v394
  %v1560 = vpop.f32.mrf.mxu0
  %v1561 = vadd.f32 %v1512, %v1560
  %v1562 = vpop.f32.mrf.mxu0
  %v1563 = vadd.f32 %v1514, %v1562
  %1564 = vmatmul.bf16.gmra.mxu0 %v401
  %v1565 = vpop.f32.mrf.mxu0
  %v1566 = vadd.f32 %v1517, %v1565
  %v1567 = vpop.f32.mrf.mxu0
  %v1568 = vadd.f32 %v1519, %v1567
  %1569 = vmatmul.bf16.gmra.mxu0 %v408
  %v1570 = vpop.f32.mrf.mxu0
  %v1571 = vadd.f32 %v1522, %v1570
  %v1572 = vpop.f32.mrf.mxu0
  %v1573 = vadd.f32 %v1524, %v1572
  %1574 = vmatmul.bf16.gmra.mxu0 %v415
  %v1575 = vpop.f32.mrf.mxu0
  %v1576 = vadd.f32 %v1527, %v1575
  %v1577 = vpop.f32.mrf.mxu0
  %v1578 = vadd.f32 %v1529, %v1577
  %1579 = vmatmul.bf16.gmra.mxu0 %v422
  %v1580 = vpop.f32.mrf.mxu0
  %v1581 = vadd.f32 %v1532, %v1580
  %v1582 = vpop.f32.mrf.mxu0
  %v1583 = vadd.f32 %v1534, %v1582
  %1584 = vmatmul.bf16.gmra.mxu0 %v429
  %v1585 = vpop.f32.mrf.mxu0
  %v1586 = vadd.f32 %v1537, %v1585
  %v1587 = vpop.f32.mrf.mxu0
  %v1588 = vadd.f32 %v1539, %v1587
  %1589 = vmatmul.bf16.gmra.mxu0 %v436
  %v1590 = vpop.f32.mrf.mxu0
  %v1591 = vadd.f32 %v1542, %v1590
  %v1592 = vpop.f32.mrf.mxu0
  %v1593 = vadd.f32 %v1544, %v1592
  %1594 = vdwg.mxu0
  %1595 = vmatpush.bf16.msra.mxu0 %v911
  %1596 = vmatpush.bf16.msra.mxu0 %v909
  %1597 = vmatpush.bf16.msra.mxu0 %v907
  %1598 = vmatpush.bf16.msra.mxu0 %v905
  %1599 = vmatpush.bf16.msra.mxu0 %v903
  %1600 = vmatpush.bf16.msra.mxu0 %v901
  %1601 = vmatpush.bf16.msra.mxu0 %v899
  %1602 = vmatpush.bf16.msra.mxu0 %v897
  %1603 = vmatmul.bf16.gmra.mxu0 %v388
  %v1604 = vpop.f32.mrf.mxu0
  %v1605 = vadd.f32 %v1556, %v1604
  %v1606 = vpop.f32.mrf.mxu0
  %v1607 = vadd.f32 %v1558, %v1606
  %1608 = vmatmul.bf16.gmra.mxu0 %v395
  %v1609 = vpop.f32.mrf.mxu0
  %v1610 = vadd.f32 %v1561, %v1609
  %v1611 = vpop.f32.mrf.mxu0
  %v1612 = vadd.f32 %v1563, %v1611
  %1613 = vmatmul.bf16.gmra.mxu0 %v402
  %v1614 = vpop.f32.mrf.mxu0
  %v1615 = vadd.f32 %v1566, %v1614
  %v1616 = vpop.f32.mrf.mxu0
  %v1617 = vadd.f32 %v1568, %v1616
  %1618 = vmatmul.bf16.gmra.mxu0 %v409
  %v1619 = vpop.f32.mrf.mxu0
  %v1620 = vadd.f32 %v1571, %v1619
  %v1621 = vpop.f32.mrf.mxu0
  %v1622 = vadd.f32 %v1573, %v1621
  %1623 = vmatmul.bf16.gmra.mxu0 %v416
  %v1624 = vpop.f32.mrf.mxu0
  %v1625 = vadd.f32 %v1576, %v1624
  %v1626 = vpop.f32.mrf.mxu0
  %v1627 = vadd.f32 %v1578, %v1626
  %1628 = vmatmul.bf16.gmra.mxu0 %v423
  %v1629 = vpop.f32.mrf.mxu0
  %v1630 = vadd.f32 %v1581, %v1629
  %v1631 = vpop.f32.mrf.mxu0
  %v1632 = vadd.f32 %v1583, %v1631
  %1633 = vmatmul.bf16.gmra.mxu0 %v430
  %v1634 = vpop.f32.mrf.mxu0
  %v1635 = vadd.f32 %v1586, %v1634
  %v1636 = vpop.f32.mrf.mxu0
  %v1637 = vadd.f32 %v1588, %v1636
  %1638 = vmatmul.bf16.gmra.mxu0 %v437
  %v1639 = vpop.f32.mrf.mxu0
  %v1640 = vadd.f32 %v1591, %v1639
  %v1641 = vpop.f32.mrf.mxu0
  %v1642 = vadd.f32 %v1593, %v1641
  %1643 = vdwg.mxu0
  %1644 = vmatpush.bf16.msra.mxu0 %v927
  %1645 = vmatpush.bf16.msra.mxu0 %v925
  %1646 = vmatpush.bf16.msra.mxu0 %v923
  %1647 = vmatpush.bf16.msra.mxu0 %v921
  %1648 = vmatpush.bf16.msra.mxu0 %v919
  %1649 = vmatpush.bf16.msra.mxu0 %v917
  %1650 = vmatpush.bf16.msra.mxu0 %v915
  %1651 = vmatpush.bf16.msra.mxu0 %v913
  %1652 = vmatmul.bf16.gmra.mxu0 %v389
  %v1653 = vpop.f32.mrf.mxu0
  %v1654 = vadd.f32 %v1605, %v1653
  %v1655 = vpop.f32.mrf.mxu0
  %v1656 = vadd.f32 %v1607, %v1655
  %1657 = vmatmul.bf16.gmra.mxu0 %v396
  %v1658 = vpop.f32.mrf.mxu0
  %v1659 = vadd.f32 %v1610, %v1658
  %v1660 = vpop.f32.mrf.mxu0
  %v1661 = vadd.f32 %v1612, %v1660
  %1662 = vmatmul.bf16.gmra.mxu0 %v403
  %v1663 = vpop.f32.mrf.mxu0
  %v1664 = vadd.f32 %v1615, %v1663
  %v1665 = vpop.f32.mrf.mxu0
  %v1666 = vadd.f32 %v1617, %v1665
  %1667 = vmatmul.bf16.gmra.mxu0 %v410
  %v1668 = vpop.f32.mrf.mxu0
  %v1669 = vadd.f32 %v1620, %v1668
  %v1670 = vpop.f32.mrf.mxu0
  %v1671 = vadd.f32 %v1622, %v1670
  %1672 = vmatmul.bf16.gmra.mxu0 %v417
  %v1673 = vpop.f32.mrf.mxu0
  %v1674 = vadd.f32 %v1625, %v1673
  %v1675 = vpop.f32.mrf.mxu0
  %v1676 = vadd.f32 %v1627, %v1675
  %1677 = vmatmul.bf16.gmra.mxu0 %v424
  %v1678 = vpop.f32.mrf.mxu0
  %v1679 = vadd.f32 %v1630, %v1678
  %v1680 = vpop.f32.mrf.mxu0
  %v1681 = vadd.f32 %v1632, %v1680
  %1682 = vmatmul.bf16.gmra.mxu0 %v431
  %v1683 = vpop.f32.mrf.mxu0
  %v1684 = vadd.f32 %v1635, %v1683
  %v1685 = vpop.f32.mrf.mxu0
  %v1686 = vadd.f32 %v1637, %v1685
  %1687 = vmatmul.bf16.gmra.mxu0 %v438
  %v1688 = vpop.f32.mrf.mxu0
  %v1689 = vadd.f32 %v1640, %v1688
  %v1690 = vpop.f32.mrf.mxu0
  %v1691 = vadd.f32 %v1642, %v1690
  %1692 = vdwg.mxu0
  %1693 = vmatpush.bf16.msra.mxu0 %v943
  %1694 = vmatpush.bf16.msra.mxu0 %v941
  %1695 = vmatpush.bf16.msra.mxu0 %v939
  %1696 = vmatpush.bf16.msra.mxu0 %v937
  %1697 = vmatpush.bf16.msra.mxu0 %v935
  %1698 = vmatpush.bf16.msra.mxu0 %v933
  %1699 = vmatpush.bf16.msra.mxu0 %v931
  %1700 = vmatpush.bf16.msra.mxu0 %v929
  %1701 = vmatmul.bf16.gmra.mxu0 %v390
  %v1702 = vpop.f32.mrf.mxu0
  %v1703 = vadd.f32 %v1654, %v1702
  %v1704 = vpop.f32.mrf.mxu0
  %v1705 = vadd.f32 %v1656, %v1704
  %1706 = vmatmul.bf16.gmra.mxu0 %v397
  %v1707 = vpop.f32.mrf.mxu0
  %v1708 = vadd.f32 %v1659, %v1707
  %v1709 = vpop.f32.mrf.mxu0
  %v1710 = vadd.f32 %v1661, %v1709
  %1711 = vmatmul.bf16.gmra.mxu0 %v404
  %v1712 = vpop.f32.mrf.mxu0
  %v1713 = vadd.f32 %v1664, %v1712
  %v1714 = vpop.f32.mrf.mxu0
  %v1715 = vadd.f32 %v1666, %v1714
  %1716 = vmatmul.bf16.gmra.mxu0 %v411
  %v1717 = vpop.f32.mrf.mxu0
  %v1718 = vadd.f32 %v1669, %v1717
  %v1719 = vpop.f32.mrf.mxu0
  %v1720 = vadd.f32 %v1671, %v1719
  %1721 = vmatmul.bf16.gmra.mxu0 %v418
  %v1722 = vpop.f32.mrf.mxu0
  %v1723 = vadd.f32 %v1674, %v1722
  %v1724 = vpop.f32.mrf.mxu0
  %v1725 = vadd.f32 %v1676, %v1724
  %1726 = vmatmul.bf16.gmra.mxu0 %v425
  %v1727 = vpop.f32.mrf.mxu0
  %v1728 = vadd.f32 %v1679, %v1727
  %v1729 = vpop.f32.mrf.mxu0
  %v1730 = vadd.f32 %v1681, %v1729
  %1731 = vmatmul.bf16.gmra.mxu0 %v432
  %v1732 = vpop.f32.mrf.mxu0
  %v1733 = vadd.f32 %v1684, %v1732
  %v1734 = vpop.f32.mrf.mxu0
  %v1735 = vadd.f32 %v1686, %v1734
  %1736 = vmatmul.bf16.gmra.mxu0 %v439
  %v1737 = vpop.f32.mrf.mxu0
  %v1738 = vadd.f32 %v1689, %v1737
  %v1739 = vpop.f32.mrf.mxu0
  %v1740 = vadd.f32 %v1691, %v1739
  %1741 = vdwg.mxu0
  %v1742 = vmax.f32 %v1360, 0.0
  %v1743 = vmax.f32 %v1703, 0.0
  %v1744 = vmax.f32 %v1362, 0.0
  %v1745 = vmax.f32 %v1705, 0.0
  %v1746 = vmax.f32 %v1365, 0.0
  %v1747 = vmax.f32 %v1708, 0.0
  %v1748 = vmax.f32 %v1367, 0.0
  %v1749 = vmax.f32 %v1710, 0.0
  %v1750 = vmax.f32 %v1370, 0.0
  %v1751 = vmax.f32 %v1713, 0.0
  %v1752 = vmax.f32 %v1372, 0.0
  %v1753 = vmax.f32 %v1715, 0.0
  %v1754 = vmax.f32 %v1375, 0.0
  %v1755 = vmax.f32 %v1718, 0.0
  %v1756 = vmax.f32 %v1377, 0.0
  %v1757 = vmax.f32 %v1720, 0.0
  %v1758 = vmax.f32 %v1380, 0.0
  %v1759 = vmax.f32 %v1723, 0.0
  %v1760 = vmax.f32 %v1382, 0.0
  %v1761 = vmax.f32 %v1725, 0.0
  %v1762 = vmax.f32 %v1385, 0.0
  %v1763 = vmax.f32 %v1728, 0.0
  %v1764 = vmax.f32 %v1387, 0.0
  %v1765 = vmax.f32 %v1730, 0.0
  %v1766 = vmax.f32 %v1390, 0.0
  %v1767 = vmax.f32 %v1733, 0.0
  %v1768 = vmax.f32 %v1392, 0.0
  %v1769 = vmax.f32 %v1735, 0.0
  %v1770 = vmax.f32 %v1395, 0.0
  %v1771 = vmax.f32 %v1738, 0.0
  %v1772 = vmax.f32 %v1397, 0.0
  %v1773 = vmax.f32 %v1740, 0.0
  %v1774 = vpack.c.bf16 %v1744, %v1742
  %v1775 = vpack.c.bf16 %v1745, %v1743
  %v1776 = vpack.c.bf16 %v1748, %v1746
  %v1777 = vpack.c.bf16 %v1749, %v1747
  %v1778 = vpack.c.bf16 %v1752, %v1750
  %v1779 = vpack.c.bf16 %v1753, %v1751
  %v1780 = vpack.c.bf16 %v1756, %v1754
  %v1781 = vpack.c.bf16 %v1757, %v1755
  %v1782 = vpack.c.bf16 %v1760, %v1758
  %v1783 = vpack.c.bf16 %v1761, %v1759
  %v1784 = vpack.c.bf16 %v1764, %v1762
  %v1785 = vpack.c.bf16 %v1765, %v1763
  %v1786 = vpack.c.bf16 %v1768, %v1766
  %v1787 = vpack.c.bf16 %v1769, %v1767
  %v1788 = vpack.c.bf16 %v1772, %v1770
  %v1789 = vpack.c.bf16 %v1773, %v1771
  %v1790 = vld [vmem:[%s3] sm:$0xff]
  %v1791 = vld [vmem:[%s3 + $0x8] sm:$0xff]
  %v1792 = vld [vmem:[%s3 + $0x10] sm:$0xff]
  %v1793 = vld [vmem:[%s3 + $0x18] sm:$0xff]
  %v1794 = vld [vmem:[%s3 + $0x20] sm:$0xff]
  %v1795 = vld [vmem:[%s3 + $0x28] sm:$0xff]
  %v1796 = vld [vmem:[%s3 + $0x30] sm:$0xff]
  %v1797 = vld [vmem:[%s3 + $0x38] sm:$0xff]
  %v1798 = vld [vmem:[%s3 + $0x40] sm:$0xff]
  %v1799 = vld [vmem:[%s3 + $0x48] sm:$0xff]
  %v1800 = vld [vmem:[%s3 + $0x50] sm:$0xff]
  %v1801 = vld [vmem:[%s3 + $0x58] sm:$0xff]
  %v1802 = vld [vmem:[%s3 + $0x60] sm:$0xff]
  %v1803 = vld [vmem:[%s3 + $0x68] sm:$0xff]
  %v1804 = vld [vmem:[%s3 + $0x70] sm:$0xff]
  %v1805 = vld [vmem:[%s3 + $0x78] sm:$0xff]
  %v1806 = vld [vmem:[%s3 + $0x80] sm:$0xff]
  %v1807 = vld [vmem:[%s3 + $0x88] sm:$0xff]
  %v1808 = vld [vmem:[%s3 + $0x90] sm:$0xff]
  %v1809 = vld [vmem:[%s3 + $0x98] sm:$0xff]
  %v1810 = vld [vmem:[%s3 + $0xa0] sm:$0xff]
  %v1811 = vld [vmem:[%s3 + $0xa8] sm:$0xff]
  %v1812 = vld [vmem:[%s3 + $0xb0] sm:$0xff]
  %v1813 = vld [vmem:[%s3 + $0xb8] sm:$0xff]
  %v1814 = vld [vmem:[%s3 + $0xc0] sm:$0xff]
  %v1815 = vld [vmem:[%s3 + $0xc8] sm:$0xff]
  %v1816 = vld [vmem:[%s3 + $0xd0] sm:$0xff]
  %v1817 = vld [vmem:[%s3 + $0xd8] sm:$0xff]
  %v1818 = vld [vmem:[%s3 + $0xe0] sm:$0xff]
  %v1819 = vld [vmem:[%s3 + $0xe8] sm:$0xff]
  %v1820 = vld [vmem:[%s3 + $0xf0] sm:$0xff]
  %v1821 = vld [vmem:[%s3 + $0xf8] sm:$0xff]
  %v1822 = vld [vmem:[%s4] sm:$0x3]
  %v1824 = vperm.slane %v1822, 0
  %v1825 = vperm.slane %v1822, 1
  %v1860 = vunpack.c.l.b16 %v1790
  %v1861 = vunpack.c.h.b16 %v1790
  %v1862 = vunpack.c.l.b16 %v1791
  %v1863 = vunpack.c.h.b16 %v1791
  %v1864 = vunpack.c.l.b16 %v1792
  %v1865 = vunpack.c.h.b16 %v1792
  %v1866 = vunpack.c.l.b16 %v1793
  %v1867 = vunpack.c.h.b16 %v1793
  %v1868 = vunpack.c.l.b16 %v1794
  %v1869 = vunpack.c.h.b16 %v1794
  %v1870 = vunpack.c.l.b16 %v1795
  %v1871 = vunpack.c.h.b16 %v1795
  %v1872 = vunpack.c.l.b16 %v1796
  %v1873 = vunpack.c.h.b16 %v1796
  %v1874 = vunpack.c.l.b16 %v1797
  %v1875 = vunpack.c.h.b16 %v1797
  %v1876 = vunpack.c.l.b16 %v1798
  %v1877 = vunpack.c.h.b16 %v1798
  %v1878 = vunpack.c.l.b16 %v1799
  %v1879 = vunpack.c.h.b16 %v1799
  %v1880 = vunpack.c.l.b16 %v1800
  %v1881 = vunpack.c.h.b16 %v1800
  %v1882 = vunpack.c.l.b16 %v1801
  %v1883 = vunpack.c.h.b16 %v1801
  %v1884 = vunpack.c.l.b16 %v1802
  %v1885 = vunpack.c.h.b16 %v1802
  %v1886 = vunpack.c.l.b16 %v1803
  %v1887 = vunpack.c.h.b16 %v1803
  %v1888 = vunpack.c.l.b16 %v1804
  %v1889 = vunpack.c.h.b16 %v1804
  %v1890 = vunpack.c.l.b16 %v1805
  %v1891 = vunpack.c.h.b16 %v1805
  %v1892 = vunpack.c.l.b16 %v1806
  %v1893 = vunpack.c.h.b16 %v1806
  %v1894 = vunpack.c.l.b16 %v1807
  %v1895 = vunpack.c.h.b16 %v1807
  %v1896 = vunpack.c.l.b16 %v1808
  %v1897 = vunpack.c.h.b16 %v1808
  %v1898 = vunpack.c.l.b16 %v1809
  %v1899 = vunpack.c.h.b16 %v1809
  %v1900 = vunpack.c.l.b16 %v1810
  %v1901 = vunpack.c.h.b16 %v1810
  %v1902 = vunpack.c.l.b16 %v1811
  %v1903 = vunpack.c.h.b16 %v1811
  %v1904 = vunpack.c.l.b16 %v1812
  %v1905 = vunpack.c.h.b16 %v1812
  %v1906 = vunpack.c.l.b16 %v1813
  %v1907 = vunpack.c.h.b16 %v1813
  %v1908 = vunpack.c.l.b16 %v1814
  %v1909 = vunpack.c.h.b16 %v1814
  %v1910 = vunpack.c.l.b16 %v1815
  %v1911 = vunpack.c.h.b16 %v1815
  %v1912 = vunpack.c.l.b16 %v1816
  %v1913 = vunpack.c.h.b16 %v1816
  %v1914 = vunpack.c.l.b16 %v1817
  %v1915 = vunpack.c.h.b16 %v1817
  %v1916 = vunpack.c.l.b16 %v1818
  %v1917 = vunpack.c.h.b16 %v1818
  %v1918 = vunpack.c.l.b16 %v1819
  %v1919 = vunpack.c.h.b16 %v1819
  %v1920 = vunpack.c.l.b16 %v1820
  %v1921 = vunpack.c.h.b16 %v1820
  %v1922 = vunpack.c.l.b16 %v1821
  %v1923 = vunpack.c.h.b16 %v1821
  %v1924 = vpack.c.b16 %v1862, %v1860
  %v1925 = vpack.c.b16 %v1863, %v1861
  %v1926 = vpack.c.b16 %v1866, %v1864
  %v1927 = vpack.c.b16 %v1867, %v1865
  %v1928 = vpack.c.b16 %v1870, %v1868
  %v1929 = vpack.c.b16 %v1871, %v1869
  %v1930 = vpack.c.b16 %v1874, %v1872
  %v1931 = vpack.c.b16 %v1875, %v1873
  %v1932 = vpack.c.b16 %v1878, %v1876
  %v1933 = vpack.c.b16 %v1879, %v1877
  %v1934 = vpack.c.b16 %v1882, %v1880
  %v1935 = vpack.c.b16 %v1883, %v1881
  %v1936 = vpack.c.b16 %v1886, %v1884
  %v1937 = vpack.c.b16 %v1887, %v1885
  %v1938 = vpack.c.b16 %v1890, %v1888
  %v1939 = vpack.c.b16 %v1891, %v1889
  %v1940 = vpack.c.b16 %v1894, %v1892
  %v1941 = vpack.c.b16 %v1895, %v1893
  %v1942 = vpack.c.b16 %v1898, %v1896
  %v1943 = vpack.c.b16 %v1899, %v1897
  %v1944 = vpack.c.b16 %v1902, %v1900
  %v1945 = vpack.c.b16 %v1903, %v1901
  %v1946 = vpack.c.b16 %v1906, %v1904
  %v1947 = vpack.c.b16 %v1907, %v1905
  %v1948 = vpack.c.b16 %v1910, %v1908
  %v1949 = vpack.c.b16 %v1911, %v1909
  %v1950 = vpack.c.b16 %v1914, %v1912
  %v1951 = vpack.c.b16 %v1915, %v1913
  %v1952 = vpack.c.b16 %v1918, %v1916
  %v1953 = vpack.c.b16 %v1919, %v1917
  %v1954 = vpack.c.b16 %v1922, %v1920
  %v1955 = vpack.c.b16 %v1923, %v1921
  %1988 = vmatpush.bf16.msra.mxu0 %v1938
  %1989 = vmatpush.bf16.msra.mxu0 %v1936
  %1990 = vmatpush.bf16.msra.mxu0 %v1934
  %1991 = vmatpush.bf16.msra.mxu0 %v1932
  %1992 = vmatpush.bf16.msra.mxu0 %v1930
  %1993 = vmatpush.bf16.msra.mxu0 %v1928
  %1994 = vmatpush.bf16.msra.mxu0 %v1926
  %1995 = vmatpush.bf16.msra.mxu0 %v1924
  %1996 = vmatmul.bf16.gmra.mxu0 %v1774
  %v1997 = vpop.f32.mrf.mxu0
  %v1998 = vadd.f32 %v1824, %v1997
  %v1999 = vpop.f32.mrf.mxu0
  %v2000 = vadd.f32 %v1824, %v1999
  %2001 = vmatmul.bf16.gmra.mxu0 %v1776
  %v2002 = vpop.f32.mrf.mxu0
  %v2003 = vadd.f32 %v1824, %v2002
  %v2004 = vpop.f32.mrf.mxu0
  %v2005 = vadd.f32 %v1824, %v2004
  %2006 = vmatmul.bf16.gmra.mxu0 %v1778
  %v2007 = vpop.f32.mrf.mxu0
  %v2008 = vadd.f32 %v1824, %v2007
  %v2009 = vpop.f32.mrf.mxu0
  %v2010 = vadd.f32 %v1824, %v2009
  %2011 = vmatmul.bf16.gmra.mxu0 %v1780
  %v2012 = vpop.f32.mrf.mxu0
  %v2013 = vadd.f32 %v1824, %v2012
  %v2014 = vpop.f32.mrf.mxu0
  %v2015 = vadd.f32 %v1824, %v2014
  %2016 = vmatmul.bf16.gmra.mxu0 %v1782
  %v2017 = vpop.f32.mrf.mxu0
  %v2018 = vadd.f32 %v1824, %v2017
  %v2019 = vpop.f32.mrf.mxu0
  %v2020 = vadd.f32 %v1824, %v2019
  %2021 = vmatmul.bf16.gmra.mxu0 %v1784
  %v2022 = vpop.f32.mrf.mxu0
  %v2023 = vadd.f32 %v1824, %v2022
  %v2024 = vpop.f32.mrf.mxu0
  %v2025 = vadd.f32 %v1824, %v2024
  %2026 = vmatmul.bf16.gmra.mxu0 %v1786
  %v2027 = vpop.f32.mrf.mxu0
  %v2028 = vadd.f32 %v1824, %v2027
  %v2029 = vpop.f32.mrf.mxu0
  %v2030 = vadd.f32 %v1824, %v2029
  %2031 = vmatmul.bf16.gmra.mxu0 %v1788
  %v2032 = vpop.f32.mrf.mxu0
  %v2033 = vadd.f32 %v1824, %v2032
  %v2034 = vpop.f32.mrf.mxu0
  %v2035 = vadd.f32 %v1824, %v2034
  %2036 = vdwg.mxu0
  %2037 = vmatpush.bf16.msra.mxu0 %v1954
  %2038 = vmatpush.bf16.msra.mxu0 %v1952
  %2039 = vmatpush.bf16.msra.mxu0 %v1950
  %2040 = vmatpush.bf16.msra.mxu0 %v1948
  %2041 = vmatpush.bf16.msra.mxu0 %v1946
  %2042 = vmatpush.bf16.msra.mxu0 %v1944
  %2043 = vmatpush.bf16.msra.mxu0 %v1942
  %2044 = vmatpush.bf16.msra.mxu0 %v1940
  %2045 = vmatmul.bf16.gmra.mxu0 %v1775
  %v2046 = vpop.f32.mrf.mxu0
  %v2047 = vadd.f32 %v1998, %v2046
  %v2048 = vpop.f32.mrf.mxu0
  %v2049 = vadd.f32 %v2000, %v2048
  %2050 = vmatmul.bf16.gmra.mxu0 %v1777
  %v2051 = vpop.f32.mrf.mxu0
  %v2052 = vadd.f32 %v2003, %v2051
  %v2053 = vpop.f32.mrf.mxu0
  %v2054 = vadd.f32 %v2005, %v2053
  %2055 = vmatmul.bf16.gmra.mxu0 %v1779
  %v2056 = vpop.f32.mrf.mxu0
  %v2057 = vadd.f32 %v2008, %v2056
  %v2058 = vpop.f32.mrf.mxu0
  %v2059 = vadd.f32 %v2010, %v2058
  %2060 = vmatmul.bf16.gmra.mxu0 %v1781
  %v2061 = vpop.f32.mrf.mxu0
  %v2062 = vadd.f32 %v2013, %v2061
  %v2063 = vpop.f32.mrf.mxu0
  %v2064 = vadd.f32 %v2015, %v2063
  %2065 = vmatmul.bf16.gmra.mxu0 %v1783
  %v2066 = vpop.f32.mrf.mxu0
  %v2067 = vadd.f32 %v2018, %v2066
  %v2068 = vpop.f32.mrf.mxu0
  %v2069 = vadd.f32 %v2020, %v2068
  %2070 = vmatmul.bf16.gmra.mxu0 %v1785
  %v2071 = vpop.f32.mrf.mxu0
  %v2072 = vadd.f32 %v2023, %v2071
  %v2073 = vpop.f32.mrf.mxu0
  %v2074 = vadd.f32 %v2025, %v2073
  %2075 = vmatmul.bf16.gmra.mxu0 %v1787
  %v2076 = vpop.f32.mrf.mxu0
  %v2077 = vadd.f32 %v2028, %v2076
  %v2078 = vpop.f32.mrf.mxu0
  %v2079 = vadd.f32 %v2030, %v2078
  %2080 = vmatmul.bf16.gmra.mxu0 %v1789
  %v2081 = vpop.f32.mrf.mxu0
  %v2082 = vadd.f32 %v2033, %v2081
  %v2083 = vpop.f32.mrf.mxu0
  %v2084 = vadd.f32 %v2035, %v2083
  %2085 = vdwg.mxu0
  %2086 = vmatpush.bf16.msra.mxu0 %v1939
  %2087 = vmatpush.bf16.msra.mxu0 %v1937
  %2088 = vmatpush.bf16.msra.mxu0 %v1935
  %2089 = vmatpush.bf16.msra.mxu0 %v1933
  %2090 = vmatpush.bf16.msra.mxu0 %v1931
  %2091 = vmatpush.bf16.msra.mxu0 %v1929
  %2092 = vmatpush.bf16.msra.mxu0 %v1927
  %2093 = vmatpush.bf16.msra.mxu0 %v1925
  %2094 = vmatmul.bf16.gmra.mxu0 %v1774
  %v2095 = vpop.f32.mrf.mxu0
  %v2096 = vadd.f32 %v1825, %v2095
  %v2097 = vpop.f32.mrf.mxu0
  %v2098 = vadd.f32 %v1825, %v2097
  %2099 = vmatmul.bf16.gmra.mxu0 %v1776
  %v2100 = vpop.f32.mrf.mxu0
  %v2101 = vadd.f32 %v1825, %v2100
  %v2102 = vpop.f32.mrf.mxu0
  %v2103 = vadd.f32 %v1825, %v2102
  %2104 = vmatmul.bf16.gmra.mxu0 %v1778
  %v2105 = vpop.f32.mrf.mxu0
  %v2106 = vadd.f32 %v1825, %v2105
  %v2107 = vpop.f32.mrf.mxu0
  %v2108 = vadd.f32 %v1825, %v2107
  %2109 = vmatmul.bf16.gmra.mxu0 %v1780
  %v2110 = vpop.f32.mrf.mxu0
  %v2111 = vadd.f32 %v1825, %v2110
  %v2112 = vpop.f32.mrf.mxu0
  %v2113 = vadd.f32 %v1825, %v2112
  %2114 = vmatmul.bf16.gmra.mxu0 %v1782
  %v2115 = vpop.f32.mrf.mxu0
  %v2116 = vadd.f32 %v1825, %v2115
  %v2117 = vpop.f32.mrf.mxu0
  %v2118 = vadd.f32 %v1825, %v2117
  %2119 = vmatmul.bf16.gmra.mxu0 %v1784
  %v2120 = vpop.f32.mrf.mxu0
  %v2121 = vadd.f32 %v1825, %v2120
  %v2122 = vpop.f32.mrf.mxu0
  %v2123 = vadd.f32 %v1825, %v2122
  %2124 = vmatmul.bf16.gmra.mxu0 %v1786
  %v2125 = vpop.f32.mrf.mxu0
  %v2126 = vadd.f32 %v1825, %v2125
  %v2127 = vpop.f32.mrf.mxu0
  %v2128 = vadd.f32 %v1825, %v2127
  %2129 = vmatmul.bf16.gmra.mxu0 %v1788
  %v2130 = vpop.f32.mrf.mxu0
  %v2131 = vadd.f32 %v1825, %v2130
  %v2132 = vpop.f32.mrf.mxu0
  %v2133 = vadd.f32 %v1825, %v2132
  %2134 = vdwg.mxu0
  %2135 = vmatpush.bf16.msra.mxu0 %v1955
  %2136 = vmatpush.bf16.msra.mxu0 %v1953
  %2137 = vmatpush.bf16.msra.mxu0 %v1951
  %2138 = vmatpush.bf16.msra.mxu0 %v1949
  %2139 = vmatpush.bf16.msra.mxu0 %v1947
  %2140 = vmatpush.bf16.msra.mxu0 %v1945
  %2141 = vmatpush.bf16.msra.mxu0 %v1943
  %2142 = vmatpush.bf16.msra.mxu0 %v1941
  %2143 = vmatmul.bf16.gmra.mxu0 %v1775
  %v2144 = vpop.f32.mrf.mxu0
  %v2145 = vadd.f32 %v2096, %v2144
  %v2146 = vpop.f32.mrf.mxu0
  %v2147 = vadd.f32 %v2098, %v2146
  %2148 = vmatmul.bf16.gmra.mxu0 %v1777
  %v2149 = vpop.f32.mrf.mxu0
  %v2150 = vadd.f32 %v2101, %v2149
  %v2151 = vpop.f32.mrf.mxu0
  %v2152 = vadd.f32 %v2103, %v2151
  %2153 = vmatmul.bf16.gmra.mxu0 %v1779
  %v2154 = vpop.f32.mrf.mxu0
  %v2155 = vadd.f32 %v2106, %v2154
  %v2156 = vpop.f32.mrf.mxu0
  %v2157 = vadd.f32 %v2108, %v2156
  %2158 = vmatmul.bf16.gmra.mxu0 %v1781
  %v2159 = vpop.f32.mrf.mxu0
  %v2160 = vadd.f32 %v2111, %v2159
  %v2161 = vpop.f32.mrf.mxu0
  %v2162 = vadd.f32 %v2113, %v2161
  %2163 = vmatmul.bf16.gmra.mxu0 %v1783
  %v2164 = vpop.f32.mrf.mxu0
  %v2165 = vadd.f32 %v2116, %v2164
  %v2166 = vpop.f32.mrf.mxu0
  %v2167 = vadd.f32 %v2118, %v2166
  %2168 = vmatmul.bf16.gmra.mxu0 %v1785
  %v2169 = vpop.f32.mrf.mxu0
  %v2170 = vadd.f32 %v2121, %v2169
  %v2171 = vpop.f32.mrf.mxu0
  %v2172 = vadd.f32 %v2123, %v2171
  %2173 = vmatmul.bf16.gmra.mxu0 %v1787
  %v2174 = vpop.f32.mrf.mxu0
  %v2175 = vadd.f32 %v2126, %v2174
  %v2176 = vpop.f32.mrf.mxu0
  %v2177 = vadd.f32 %v2128, %v2176
  %2178 = vmatmul.bf16.gmra.mxu0 %v1789
  %v2179 = vpop.f32.mrf.mxu0
  %v2180 = vadd.f32 %v2131, %v2179
  %v2181 = vpop.f32.mrf.mxu0
  %v2182 = vadd.f32 %v2133, %v2181
  %2183 = vdwg.mxu0
  %v2184 = vmax.f32 %v2047, 0.0
  %v2185 = vmax.f32 %v2145, 0.0
  %v2186 = vmax.f32 %v2049, 0.0
  %v2187 = vmax.f32 %v2147, 0.0
  %v2188 = vmax.f32 %v2052, 0.0
  %v2189 = vmax.f32 %v2150, 0.0
  %v2190 = vmax.f32 %v2054, 0.0
  %v2191 = vmax.f32 %v2152, 0.0
  %v2192 = vmax.f32 %v2057, 0.0
  %v2193 = vmax.f32 %v2155, 0.0
  %v2194 = vmax.f32 %v2059, 0.0
  %v2195 = vmax.f32 %v2157, 0.0
  %v2196 = vmax.f32 %v2062, 0.0
  %v2197 = vmax.f32 %v2160, 0.0
  %v2198 = vmax.f32 %v2064, 0.0
  %v2199 = vmax.f32 %v2162, 0.0
  %v2200 = vmax.f32 %v2067, 0.0
  %v2201 = vmax.f32 %v2165, 0.0
  %v2202 = vmax.f32 %v2069, 0.0
  %v2203 = vmax.f32 %v2167, 0.0
  %v2204 = vmax.f32 %v2072, 0.0
  %v2205 = vmax.f32 %v2170, 0.0
  %v2206 = vmax.f32 %v2074, 0.0
  %v2207 = vmax.f32 %v2172, 0.0
  %v2208 = vmax.f32 %v2077, 0.0
  %v2209 = vmax.f32 %v2175, 0.0
  %v2210 = vmax.f32 %v2079, 0.0
  %v2211 = vmax.f32 %v2177, 0.0
  %v2212 = vmax.f32 %v2082, 0.0
  %v2213 = vmax.f32 %v2180, 0.0
  %v2214 = vmax.f32 %v2084, 0.0
  %v2215 = vmax.f32 %v2182, 0.0
  %v2216 = vpack.c.bf16 %v2186, %v2184
  %v2217 = vpack.c.bf16 %v2187, %v2185
  %v2218 = vpack.c.bf16 %v2190, %v2188
  %v2219 = vpack.c.bf16 %v2191, %v2189
  %v2220 = vpack.c.bf16 %v2194, %v2192
  %v2221 = vpack.c.bf16 %v2195, %v2193
  %v2222 = vpack.c.bf16 %v2198, %v2196
  %v2223 = vpack.c.bf16 %v2199, %v2197
  %v2224 = vpack.c.bf16 %v2202, %v2200
  %v2225 = vpack.c.bf16 %v2203, %v2201
  %v2226 = vpack.c.bf16 %v2206, %v2204
  %v2227 = vpack.c.bf16 %v2207, %v2205
  %v2228 = vpack.c.bf16 %v2210, %v2208
  %v2229 = vpack.c.bf16 %v2211, %v2209
  %v2230 = vpack.c.bf16 %v2214, %v2212
  %v2231 = vpack.c.bf16 %v2215, %v2213
  %v2232 = vld [vmem:[%s5] sm:$0xf]
  %v2233 = vld [vmem:[%s5 + $0x4] sm:$0xf]
  %v2234 = vld [vmem:[%s5 + $0x8] sm:$0xf]
  %v2235 = vld [vmem:[%s5 + $0xc] sm:$0xf]
  %v2236 = vld [vmem:[%s5 + $0x10] sm:$0xf]
  %v2237 = vld [vmem:[%s5 + $0x14] sm:$0xf]
  %v2238 = vld [vmem:[%s5 + $0x18] sm:$0xf]
  %v2239 = vld [vmem:[%s5 + $0x1c] sm:$0xf]
  %v2240 = vld [vmem:[%s5 + $0x20] sm:$0xf]
  %v2241 = vld [vmem:[%s5 + $0x24] sm:$0xf]
  %v2242 = vld [vmem:[%s5 + $0x28] sm:$0xf]
  %v2243 = vld [vmem:[%s5 + $0x2c] sm:$0xf]
  %v2244 = vld [vmem:[%s5 + $0x30] sm:$0xf]
  %v2245 = vld [vmem:[%s5 + $0x34] sm:$0xf]
  %v2246 = vld [vmem:[%s5 + $0x38] sm:$0xf]
  %v2247 = vld [vmem:[%s5 + $0x3c] sm:$0xf]
  %v2248 = vld [vmem:[%s5 + $0x40] sm:$0xf]
  %v2249 = vld [vmem:[%s5 + $0x44] sm:$0xf]
  %v2250 = vld [vmem:[%s5 + $0x48] sm:$0xf]
  %v2251 = vld [vmem:[%s5 + $0x4c] sm:$0xf]
  %v2252 = vld [vmem:[%s5 + $0x50] sm:$0xf]
  %v2253 = vld [vmem:[%s5 + $0x54] sm:$0xf]
  %v2254 = vld [vmem:[%s5 + $0x58] sm:$0xf]
  %v2255 = vld [vmem:[%s5 + $0x5c] sm:$0xf]
  %v2256 = vld [vmem:[%s5 + $0x60] sm:$0xf]
  %v2257 = vld [vmem:[%s5 + $0x64] sm:$0xf]
  %v2258 = vld [vmem:[%s5 + $0x68] sm:$0xf]
  %v2259 = vld [vmem:[%s5 + $0x6c] sm:$0xf]
  %v2260 = vld [vmem:[%s5 + $0x70] sm:$0xf]
  %v2261 = vld [vmem:[%s5 + $0x74] sm:$0xf]
  %v2262 = vld [vmem:[%s5 + $0x78] sm:$0xf]
  %v2263 = vld [vmem:[%s5 + $0x7c] sm:$0xf]
  %v2264 = vld [vmem:[%s6] sm:$0x1]
  %v2266 = vperm.slane %v2264, 0
  %v2300 = vunpack.c.l.b16 %v2232
  %v2301 = vunpack.c.l.b16 %v2233
  %v2302 = vunpack.c.l.b16 %v2234
  %v2303 = vunpack.c.l.b16 %v2235
  %v2304 = vunpack.c.l.b16 %v2236
  %v2305 = vunpack.c.l.b16 %v2237
  %v2306 = vunpack.c.l.b16 %v2238
  %v2307 = vunpack.c.l.b16 %v2239
  %v2308 = vunpack.c.l.b16 %v2240
  %v2309 = vunpack.c.l.b16 %v2241
  %v2310 = vunpack.c.l.b16 %v2242
  %v2311 = vunpack.c.l.b16 %v2243
  %v2312 = vunpack.c.l.b16 %v2244
  %v2313 = vunpack.c.l.b16 %v2245
  %v2314 = vunpack.c.l.b16 %v2246
  %v2315 = vunpack.c.l.b16 %v2247
  %v2316 = vunpack.c.l.b16 %v2248
  %v2317 = vunpack.c.l.b16 %v2249
  %v2318 = vunpack.c.l.b16 %v2250
  %v2319 = vunpack.c.l.b16 %v2251
  %v2320 = vunpack.c.l.b16 %v2252
  %v2321 = vunpack.c.l.b16 %v2253
  %v2322 = vunpack.c.l.b16 %v2254
  %v2323 = vunpack.c.l.b16 %v2255
  %v2324 = vunpack.c.l.b16 %v2256
  %v2325 = vunpack.c.l.b16 %v2257
  %v2326 = vunpack.c.l.b16 %v2258
  %v2327 = vunpack.c.l.b16 %v2259
  %v2328 = vunpack.c.l.b16 %v2260
  %v2329 = vunpack.c.l.b16 %v2261
  %v2330 = vunpack.c.l.b16 %v2262
  %v2331 = vunpack.c.l.b16 %v2263
  %v2332 = vpack.c.b16 %v2301, %v2300
  %v2333 = vpack.c.b16 %v2303, %v2302
  %v2334 = vpack.c.b16 %v2305, %v2304
  %v2335 = vpack.c.b16 %v2307, %v2306
  %v2336 = vpack.c.b16 %v2309, %v2308
  %v2337 = vpack.c.b16 %v2311, %v2310
  %v2338 = vpack.c.b16 %v2313, %v2312
  %v2339 = vpack.c.b16 %v2315, %v2314
  %v2340 = vpack.c.b16 %v2317, %v2316
  %v2341 = vpack.c.b16 %v2319, %v2318
  %v2342 = vpack.c.b16 %v2321, %v2320
  %v2343 = vpack.c.b16 %v2323, %v2322
  %v2344 = vpack.c.b16 %v2325, %v2324
  %v2345 = vpack.c.b16 %v2327, %v2326
  %v2346 = vpack.c.b16 %v2329, %v2328
  %v2347 = vpack.c.b16 %v2331, %v2330
  %2364 = vmatpush.bf16.msra.mxu0 %v2339
  %2365 = vmatpush.bf16.msra.mxu0 %v2338
  %2366 = vmatpush.bf16.msra.mxu0 %v2337
  %2367 = vmatpush.bf16.msra.mxu0 %v2336
  %2368 = vmatpush.bf16.msra.mxu0 %v2335
  %2369 = vmatpush.bf16.msra.mxu0 %v2334
  %2370 = vmatpush.bf16.msra.mxu0 %v2333
  %2371 = vmatpush.bf16.msra.mxu0 %v2332
  %2372 = vmatmul.bf16.gmra.mxu0 %v2216
  %v2373 = vpop.f32.mrf.mxu0
  %v2374 = vadd.f32 %v2266, %v2373
  %v2375 = vpop.f32.mrf.mxu0
  %v2376 = vadd.f32 %v2266, %v2375
  %2377 = vmatmul.bf16.gmra.mxu0 %v2218
  %v2378 = vpop.f32.mrf.mxu0
  %v2379 = vadd.f32 %v2266, %v2378
  %v2380 = vpop.f32.mrf.mxu0
  %v2381 = vadd.f32 %v2266, %v2380
  %2382 = vmatmul.bf16.gmra.mxu0 %v2220
  %v2383 = vpop.f32.mrf.mxu0
  %v2384 = vadd.f32 %v2266, %v2383
  %v2385 = vpop.f32.mrf.mxu0
  %v2386 = vadd.f32 %v2266, %v2385
  %2387 = vmatmul.bf16.gmra.mxu0 %v2222
  %v2388 = vpop.f32.mrf.mxu0
  %v2389 = vadd.f32 %v2266, %v2388
  %v2390 = vpop.f32.mrf.mxu0
  %v2391 = vadd.f32 %v2266, %v2390
  %2392 = vmatmul.bf16.gmra.mxu0 %v2224
  %v2393 = vpop.f32.mrf.mxu0
  %v2394 = vadd.f32 %v2266, %v2393
  %v2395 = vpop.f32.mrf.mxu0
  %v2396 = vadd.f32 %v2266, %v2395
  %2397 = vmatmul.bf16.gmra.mxu0 %v2226
  %v2398 = vpop.f32.mrf.mxu0
  %v2399 = vadd.f32 %v2266, %v2398
  %v2400 = vpop.f32.mrf.mxu0
  %v2401 = vadd.f32 %v2266, %v2400
  %2402 = vmatmul.bf16.gmra.mxu0 %v2228
  %v2403 = vpop.f32.mrf.mxu0
  %v2404 = vadd.f32 %v2266, %v2403
  %v2405 = vpop.f32.mrf.mxu0
  %v2406 = vadd.f32 %v2266, %v2405
  %2407 = vmatmul.bf16.gmra.mxu0 %v2230
  %v2408 = vpop.f32.mrf.mxu0
  %v2409 = vadd.f32 %v2266, %v2408
  %v2410 = vpop.f32.mrf.mxu0
  %v2411 = vadd.f32 %v2266, %v2410
  %2412 = vdwg.mxu0
  %2413 = vmatpush.bf16.msra.mxu0 %v2347
  %2414 = vmatpush.bf16.msra.mxu0 %v2346
  %2415 = vmatpush.bf16.msra.mxu0 %v2345
  %2416 = vmatpush.bf16.msra.mxu0 %v2344
  %2417 = vmatpush.bf16.msra.mxu0 %v2343
  %2418 = vmatpush.bf16.msra.mxu0 %v2342
  %2419 = vmatpush.bf16.msra.mxu0 %v2341
  %2420 = vmatpush.bf16.msra.mxu0 %v2340
  %2421 = vmatmul.bf16.gmra.mxu0 %v2217
  %v2422 = vpop.f32.mrf.mxu0
  %v2423 = vadd.f32 %v2374, %v2422
  %v2424 = vpop.f32.mrf.mxu0
  %v2425 = vadd.f32 %v2376, %v2424
  %2426 = vmatmul.bf16.gmra.mxu0 %v2219
  %v2427 = vpop.f32.mrf.mxu0
  %v2428 = vadd.f32 %v2379, %v2427
  %v2429 = vpop.f32.mrf.mxu0
  %v2430 = vadd.f32 %v2381, %v2429
  %2431 = vmatmul.bf16.gmra.mxu0 %v2221
  %v2432 = vpop.f32.mrf.mxu0
  %v2433 = vadd.f32 %v2384, %v2432
  %v2434 = vpop.f32.mrf.mxu0
  %v2435 = vadd.f32 %v2386, %v2434
  %2436 = vmatmul.bf16.gmra.mxu0 %v2223
  %v2437 = vpop.f32.mrf.mxu0
  %v2438 = vadd.f32 %v2389, %v2437
  %v2439 = vpop.f32.mrf.mxu0
  %v2440 = vadd.f32 %v2391, %v2439
  %2441 = vmatmul.bf16.gmra.mxu0 %v2225
  %v2442 = vpop.f32.mrf.mxu0
  %v2443 = vadd.f32 %v2394, %v2442
  %v2444 = vpop.f32.mrf.mxu0
  %v2445 = vadd.f32 %v2396, %v2444
  %2446 = vmatmul.bf16.gmra.mxu0 %v2227
  %v2447 = vpop.f32.mrf.mxu0
  %v2448 = vadd.f32 %v2399, %v2447
  %v2449 = vpop.f32.mrf.mxu0
  %v2450 = vadd.f32 %v2401, %v2449
  %2451 = vmatmul.bf16.gmra.mxu0 %v2229
  %v2452 = vpop.f32.mrf.mxu0
  %v2453 = vadd.f32 %v2404, %v2452
  %v2454 = vpop.f32.mrf.mxu0
  %v2455 = vadd.f32 %v2406, %v2454
  %2456 = vmatmul.bf16.gmra.mxu0 %v2231
  %v2457 = vpop.f32.mrf.mxu0
  %v2458 = vadd.f32 %v2409, %v2457
  %v2459 = vpop.f32.mrf.mxu0
  %v2460 = vadd.f32 %v2411, %v2459
  %2461 = vdwg.mxu0
  %2462 = vst [vmem:[%s7] sm:$0xff] %v2423
  %2463 = vst [vmem:[%s7 + $0x8] sm:$0xff] %v2425
  %2464 = vst [vmem:[%s7 + $0x10] sm:$0xff] %v2428
  %2465 = vst [vmem:[%s7 + $0x18] sm:$0xff] %v2430
  %2466 = vst [vmem:[%s7 + $0x20] sm:$0xff] %v2433
  %2467 = vst [vmem:[%s7 + $0x28] sm:$0xff] %v2435
  %2468 = vst [vmem:[%s7 + $0x30] sm:$0xff] %v2438
  %2469 = vst [vmem:[%s7 + $0x38] sm:$0xff] %v2440
  %2470 = vst [vmem:[%s7 + $0x40] sm:$0xff] %v2443
  %2471 = vst [vmem:[%s7 + $0x48] sm:$0xff] %v2445
  %2472 = vst [vmem:[%s7 + $0x50] sm:$0xff] %v2448
  %2473 = vst [vmem:[%s7 + $0x58] sm:$0xff] %v2450
  %2474 = vst [vmem:[%s7 + $0x60] sm:$0xff] %v2453
  %2475 = vst [vmem:[%s7 + $0x68] sm:$0xff] %v2455
  %2476 = vst [vmem:[%s7 + $0x70] sm:$0xff] %v2458
  %2477 = vst [vmem:[%s7 + $0x78] sm:$0xff] %v2460
  // Predicated region
  $region30: #{mlp_forward.1} parent=0 // pred_check
    _
  $region31: #{mlp_forward.1} parent=0 // pred_check_branch
    %2479 = sbr.rel (0) target = $region33
  $region32: #{mlp_forward.1} parent=0 // pred_region
    _
  $region33: #{mlp_forward.1} parent=0 // pred_fallthru
    _
  // Predicated region
  $region34: #{mlp_forward.1} parent=0 // pred_check
    _
  $region35: #{mlp_forward.1} parent=0 // pred_check_branch
    %2481 = sbr.rel (0) target = $region37
  $region36: #{mlp_forward.1} parent=0 // pred_region
    _
  $region37: #{mlp_forward.1} parent=0 // pred_fallthru
    _

</llo_original>
